<compile_context>
chip_gen: v6e
topology: v6e:2x2x1
jax: 0.10.0
libtpu: 0.0.40
codegen_flags: <defaults>
</compile_context>

<pallas_src>
import functools

import jax
import jax.numpy as jnp
from jax.experimental import pallas as pl
from jax.experimental.pallas import tpu as pltpu


def _network_kernel(x_ref, wp_ref, wnt_ref, out_ref, acc_ref, *, inv_spatial):
    """One grid step = (batch row b, spatial tile s).

    x_ref   : (Cin_p, tile_S)      f32   input tile (channels on sublanes, spatial on lanes)
    wp_ref  : (Cin_p, 1280)        bf16  backbone-proxy pointwise projection
    wnt_ref : (1280, classes_pad)  f32   fc.weight: pre-L2-normalized, transposed, lane-padded
    out_ref : (1, classes_pad)     f32   cosine similarities for batch row b
    acc_ref : (1, 1280)            f32   running spatial sum of SiLU(features)
    """
    s = pl.program_id(1)

    @pl.when(s == 0)
    def _init():
        acc_ref[...] = jnp.zeros_like(acc_ref)

    # --- backbone proxy: pointwise projection Cin -> 1280 (MXU, bf16 in / f32 acc) ---
    xt = jnp.transpose(x_ref[...]).astype(jnp.bfloat16)            # (tile_S, Cin_p)
    feat = jnp.dot(xt, wp_ref[...],
                   preferred_element_type=jnp.float32)             # (tile_S, 1280) f32

    # SiLU: exp + approx reciprocal run on the EUP slot; clamp prevents exp overflow.
    sig = pl.reciprocal(1.0 + jnp.exp(jnp.minimum(-feat, 60.0)), approx=True)
    feat = feat * sig

    # --- fused global average pool: accumulate the spatial sum across grid steps ---
    acc_ref[...] += jnp.sum(feat, axis=0, keepdims=True)           # (1, 1280)

    # --- epilogue on the last spatial tile: cosine similarity against fc.weight ---
    @pl.when(s == pl.num_programs(1) - 1)
    def _finalize():
        pooled = acc_ref[...] * inv_spatial                        # mean over H*W
        sumsq = jnp.sum(pooled * pooled, axis=-1, keepdims=True)   # (1, 1)
        # 1 / max(||t||, 1e-8); fc.weight rows were pre-normalized on the host.
        t_n = pooled * jax.lax.rsqrt(jnp.maximum(sumsq, 1e-16))
        sims = jnp.dot(t_n, wnt_ref[...],
                       preferred_element_type=jnp.float32)         # (1, classes_pad)
        out_ref[...] = sims.astype(out_ref.dtype)


def network_forward(x_nchw, w_proj, w_fc, *, eps=1e-8):
    """x_nchw: (B, Cin, H, W) f32; w_proj: (Cin, 1280); w_fc: (classes, 1280).
    Returns (B, classes) pairwise cosine similarities."""
    B, Cin, H, W = x_nchw.shape
    S = H * W
    FEAT = w_proj.shape[1]
    classes = w_fc.shape[0]

    # ---- host-side constant prep / layout plumbing (no NCHW->NHWC transpose of x) ----
    Cin_p = ((Cin + 7) // 8) * 8                       # sublane-align the channel axis
    x = x_nchw.reshape(B, Cin, S)                      # free reshape of NCHW
    if Cin_p != Cin:
        x = jnp.zeros((B, Cin_p, S), x.dtype).at[:, :Cin, :].set(x)
        w_proj = jnp.zeros((Cin_p, FEAT), w_proj.dtype).at[:Cin, :].set(w_proj)
    wp = w_proj.astype(jnp.bfloat16)                   # bf16 MXU operand (f32 accumulate)

    # fc.weight is constant across calls: normalize + transpose + lane-pad once here.
    classes_pad = ((classes + 127) // 128) * 128
    w_fc32 = w_fc.astype(jnp.float32)
    w_norm = jnp.sqrt(jnp.sum(w_fc32 * w_fc32, axis=-1, keepdims=True))
    w_n = w_fc32 / jnp.maximum(w_norm, eps)            # (classes, 1280)
    w_nt = jnp.zeros((FEAT, classes_pad), jnp.float32).at[:, :classes].set(w_n.T)

    # ---- grid: (batch, spatial tiles); spatial axis is the pooled reduction ----
    tile_S = 128 if S % 128 == 0 else S
    n_s = S // tile_S

    kernel = functools.partial(_network_kernel, inv_spatial=1.0 / float(S))

    out = pl.pallas_call(
        kernel,
        out_shape=jax.ShapeDtypeStruct((B, 1, classes_pad), jnp.float32),
        grid_spec=pltpu.PrefetchScalarGridSpec(
            num_scalar_prefetch=0,
            grid=(B, n_s),
            in_specs=[
                pl.BlockSpec((None, Cin_p, tile_S), lambda b, s: (b, 0, s)),
                pl.BlockSpec((Cin_p, FEAT), lambda b, s: (0, 0)),
                pl.BlockSpec((FEAT, classes_pad), lambda b, s: (0, 0)),
            ],
            out_specs=pl.BlockSpec((None, 1, classes_pad), lambda b, s: (b, 0, 0)),
            scratch_shapes=[pltpu.VMEM((1, FEAT), jnp.float32)],
        ),
        compiler_params=pltpu.CompilerParams(
            dimension_semantics=("parallel", "arbitrary")),
    )(x, wp, w_nt)

    return out.reshape(B, classes_pad)[:, :classes]


if __name__ == "__main__":
    B, Cin, H, W = 2, 4, 16, 16
    FEAT = 1280
    CLASSES = 10

    key = jax.random.PRNGKey(0)
    kx, kp, kf = jax.random.split(key, 3)

    x = jax.random.normal(kx, (B, Cin, H, W), dtype=jnp.float32)
    # Deterministic synthetic parameters (shapes implied by the module __init__).
    w_proj = jax.random.normal(kp, (Cin, FEAT), dtype=jnp.float32) * 0.05   # backbone proxy
    w_fc = jax.random.normal(kf, (CLASSES, FEAT), dtype=jnp.float32) * 0.05  # nn.Linear(1280, classes, bias=False).weight

    out = network_forward(x, w_proj, w_fc)
    out = jax.block_until_ready(out)

    assert out.shape == (B, CLASSES), out.shape
    assert bool(jnp.all(jnp.isfinite(out)))
    # cosine similarities must lie in [-1, 1] (small numerical slack)
    assert bool(jnp.all(jnp.abs(out) <= 1.0 + 1e-5))

    print("KERNEL_OK")
</pallas_src>

<mosaic_0001>
module attributes {stable_mosaic.version = 11 : i64} {
  func.func @_network_kernel(%arg0: i32, %arg1: i32, %arg2: memref<1x8x128xf32, #tpu.memory_space<vmem>>, %arg3: memref<8x1280xbf16, #tpu.memory_space<vmem>>, %arg4: memref<1280x128xf32, #tpu.memory_space<vmem>>, %arg5: memref<1x1x128xf32, #tpu.memory_space<vmem>>, %arg6: memref<1x1280xf32, #tpu.memory_space<vmem>>) attributes {dimension_semantics = [#tpu.dimension_semantics<parallel>, #tpu.dimension_semantics<arbitrary>], iteration_bounds = array<i64: 2, 2>, scalar_prefetch = 0 : i64, scratch_operands = 1 : i64, tpu.core_type = #tpu.core_type<tc>, window_params = [{transform_indices = @transform_0, window_bounds = array<i64: 1, 8, 128>}, {pipeline_mode = #tpu.pipeline_mode<synchronous>, transform_indices = @transform_1, window_bounds = array<i64: 8, 1280>}, {pipeline_mode = #tpu.pipeline_mode<synchronous>, transform_indices = @transform_2, window_bounds = array<i64: 1280, 128>}, {transform_indices = @transform_3, window_bounds = array<i64: 1, 1, 128>}]} {
    %c0_i32 = arith.constant 0 : i32
    %0 = arith.cmpi eq, %arg1, %c0_i32 : i32
    %1 = arith.extui %0 : i1 to i32
    %c0_i32_0 = arith.constant 0 : i32
    %2 = arith.cmpi ne, %1, %c0_i32_0 : i32
    scf.if %2 {
      %cst_14 = arith.constant 0.000000e+00 : f32
      %26 = vector.broadcast %cst_14 : f32 to vector<1x1280xf32>
      %c0_15 = arith.constant 0 : index
      %c0_16 = arith.constant 0 : index
      %27 = vector.load %arg6[%c0_15, %c0_16] : memref<1x1280xf32, #tpu.memory_space<vmem>>, vector<1x1280xf32>
      tpu.vector_store %arg6[%c0_15, %c0_16], %26 {strides = array<i32>} : memref<1x1280xf32, #tpu.memory_space<vmem>>, vector<1x1280xf32>,
    } else {
    }
    %c0 = arith.constant 0 : index
    %c0_1 = arith.constant 0 : index
    %c0_2 = arith.constant 0 : index
    %3 = vector.load %arg2[%c0, %c0_1, %c0_2] : memref<1x8x128xf32, #tpu.memory_space<vmem>>, vector<1x8x128xf32>
    %4 = vector.shape_cast %3 : vector<1x8x128xf32> to vector<8x128xf32>
    %5 = tpu.transpose %4, [1, 0] : vector<8x128xf32> -> vector<128x8xf32>
    %6 = arith.truncf %5 : vector<128x8xf32> to vector<128x8xbf16>
    %c0_3 = arith.constant 0 : index
    %c0_4 = arith.constant 0 : index
    %7 = vector.load %arg3[%c0_3, %c0_4] : memref<8x1280xbf16, #tpu.memory_space<vmem>>, vector<8x1280xbf16>
    %cst = arith.constant dense<0.000000e+00> : vector<128x1280xf32>
    %8 = tpu.matmul %6, %7, %cst {dimension_numbers = #tpu.dot_dimension_numbers<[1], [0], [0], [1], [0, 0, 1, 1], [], []>} : vector<128x8xbf16>, vector<8x1280xbf16>, vector<128x1280xf32> -> vector<128x1280xf32>
    %cst_5 = arith.constant 0.000000e+00 : f32
    %9 = vector.broadcast %cst_5 : f32 to vector<128x1280xf32>
    %10 = arith.subf %9, %8 : vector<128x1280xf32>
    %cst_6 = arith.constant 6.000000e+01 : f32
    %11 = vector.broadcast %cst_6 : f32 to vector<128x1280xf32>
    %12 = arith.minimumf %10, %11 : vector<128x1280xf32>
    %13 = math.exp %12 : vector<128x1280xf32>
    %cst_7 = arith.constant 1.000000e+00 : f32
    %14 = vector.broadcast %cst_7 : f32 to vector<128x1280xf32>
    %15 = arith.addf %14, %13 : vector<128x1280xf32>
    %16 = tpu.reciprocal %15 {approx = true} : vector<128x1280xf32> -> vector<128x1280xf32>
    %17 = arith.mulf %8, %16 : vector<128x1280xf32>
    %c0_8 = arith.constant 0 : index
    %c0_9 = arith.constant 0 : index
    %18 = vector.load %arg6[%c0_8, %c0_9] : memref<1x1280xf32, #tpu.memory_space<vmem>>, vector<1x1280xf32>
    %cst_10 = arith.constant dense<0.000000e+00> : vector<1280xf32>
    %19 = vector.multi_reduction <add>, %17, %cst_10 [0] : vector<128x1280xf32> to vector<1280xf32>
    %20 = vector.shape_cast %19 : vector<1280xf32> to vector<1x1280xf32>
    %21 = arith.addf %18, %20 : vector<1x1280xf32>
    %c0_11 = arith.constant 0 : index
    %c0_12 = arith.constant 0 : index
    %22 = vector.load %arg6[%c0_11, %c0_12] : memref<1x1280xf32, #tpu.memory_space<vmem>>, vector<1x1280xf32>
    tpu.vector_store %arg6[%c0_11, %c0_12], %21 {strides = array<i32>} : memref<1x1280xf32, #tpu.memory_space<vmem>>, vector<1x1280xf32>,
    %c1_i32 = arith.constant 1 : i32
    %23 = arith.cmpi eq, %arg1, %c1_i32 : i32
    %24 = arith.extui %23 : i1 to i32
    %c0_i32_13 = arith.constant 0 : i32
    %25 = arith.cmpi ne, %24, %c0_i32_13 : i32
    scf.if %25 {
      %c0_14 = arith.constant 0 : index
      %c0_15 = arith.constant 0 : index
      %26 = vector.load %arg6[%c0_14, %c0_15] : memref<1x1280xf32, #tpu.memory_space<vmem>>, vector<1x1280xf32>
      %cst_16 = arith.constant 3.906250e-03 : f32
      %27 = vector.broadcast %cst_16 : f32 to vector<1x1280xf32>
      %28 = arith.mulf %26, %27 : vector<1x1280xf32>
      %29 = arith.mulf %28, %28 : vector<1x1280xf32>
      %cst_17 = arith.constant dense<0.000000e+00> : vector<1xf32>
      %30 = vector.multi_reduction <add>, %29, %cst_17 [1] : vector<1x1280xf32> to vector<1xf32>
      %31 = vector.shape_cast %30 : vector<1xf32> to vector<1x1xf32>
      %cst_18 = arith.constant 1.000000e-16 : f32
      %32 = vector.broadcast %cst_18 : f32 to vector<1x1xf32>
      %33 = arith.maximumf %31, %32 : vector<1x1xf32>
      %34 = math.rsqrt %33 : vector<1x1xf32>
      %35 = vector.broadcast %34 : vector<1x1xf32> to vector<1x1280xf32>
      %36 = arith.mulf %28, %35 : vector<1x1280xf32>
      %c0_19 = arith.constant 0 : index
      %c0_20 = arith.constant 0 : index
      %37 = vector.load %arg4[%c0_19, %c0_20] : memref<1280x128xf32, #tpu.memory_space<vmem>>, vector<1280x128xf32>
      %cst_21 = arith.constant dense<0.000000e+00> : vector<1x128xf32>
      %38 = tpu.matmul %36, %37, %cst_21 {dimension_numbers = #tpu.dot_dimension_numbers<[1], [0], [0], [1], [0, 0, 1, 1], [], []>} : vector<1x1280xf32>, vector<1280x128xf32>, vector<1x128xf32> -> vector<1x128xf32>
      %c0_22 = arith.constant 0 : index
      %c0_23 = arith.constant 0 : index
      %c0_24 = arith.constant 0 : index
      %39 = vector.load %arg5[%c0_22, %c0_23, %c0_24] : memref<1x1x128xf32, #tpu.memory_space<vmem>>, vector<1x1x128xf32>
      %40 = vector.shape_cast %39 : vector<1x1x128xf32> to vector<1x128xf32>
      %41 = vector.shape_cast %38 : vector<1x128xf32> to vector<1x1x128xf32>
      tpu.vector_store %arg5[%c0_22, %c0_23, %c0_24], %41 {strides = array<i32>} : memref<1x1x128xf32, #tpu.memory_space<vmem>>, vector<1x1x128xf32>,
    } else {
    }
    return
  }
  func.func @transform_0(%arg0: i32, %arg1: i32) -> (i32, i32, i32) {
    %c0_i32 = arith.constant 0 : i32
    %c0_i32_0 = arith.constant 0 : i32
    return %arg0, %c0_i32, %arg1 : i32, i32, i32
  }
  func.func @transform_1(%arg0: i32, %arg1: i32) -> (i32, i32) {
    %c0_i32 = arith.constant 0 : i32
    %c0_i32_0 = arith.constant 0 : i32
    %c0_i32_1 = arith.constant 0 : i32
    return %c0_i32, %c0_i32_0 : i32, i32
  }
  func.func @transform_2(%arg0: i32, %arg1: i32) -> (i32, i32) {
    %c0_i32 = arith.constant 0 : i32
    %c0_i32_0 = arith.constant 0 : i32
    %c0_i32_1 = arith.constant 0 : i32
    return %c0_i32, %c0_i32_0 : i32, i32
  }
  func.func @transform_3(%arg0: i32, %arg1: i32) -> (i32, i32, i32) {
    %c0_i32 = arith.constant 0 : i32
    %c0_i32_0 = arith.constant 0 : i32
    %c0_i32_1 = arith.constant 0 : i32
    return %arg0, %c0_i32, %c0_i32_0 : i32, i32, i32
  }
}

</mosaic_0001>

<llo_original>
// kernel: tpu_custom_call.1
$region0: #{tpu_custom_call.1}
  #allocation0 [shape = 'u32[]', space=smem, size = 0x4, offset = 0x4, fixed_abs, tag = 'smem constant byte address 0x4 - core index']
  #allocation1 [shape = 'u32[144,128]{1,0:T(1,128)}', space=vmem, size = 0x12000, scoped, tag = 'internal scratch']
  #allocation2 [shape = 'f32[1,1280]{1,0:T(1,128)}', space=vmem, size = 0x1400, scoped, tag = 'scratch operand']
  %s0 = inlined_call_operand.hbm [shape: f32[2,8,256], index: 0, kind: input, shape index: {}]
  %s1 = inlined_call_operand.hbm [shape: bf16[8,1280], index: 1, kind: input, shape index: {}]
  %s2 = inlined_call_operand.hbm [shape: f32[1280,128], index: 2, kind: input, shape index: {}]
  %s3 = inlined_call_operand.hbm [shape: f32[2,1,128], index: 3, kind: output, shape index: {}]
  %s4 = sld [smem:[#allocation0]]
  $region65: #{tpu_custom_call.1} parent=0
    _
  %s6 = ssub.s32 1, %s4
  %s7 = scalar_select 0, %s6, %s4
  $region1: #{tpu_custom_call.1} parent=0
    #allocation3 [shape = 'u8[8192]{0}', space=vmem, size = 0x2000, scoped, tag = 'input window, operand 0']
    #allocation4 [shape = 's32[2]{0}', space=sflag, size = 0x8, scoped, tag = 'scoped memory for tpu_custom_call.1']
    #allocation5 [shape = 's32[2]{0}', space=sflag, size = 0x8, scoped, tag = 'scoped memory for tpu_custom_call.1']
    #allocation6 [shape = 'u8[20480]{0}', space=vmem, size = 0x5000, scoped, tag = 'input window, operand 1, single buffered']
    #allocation7 [shape = 's32[1]{0}', space=sflag, size = 0x4, scoped, tag = 'scoped memory for tpu_custom_call.1']
    #allocation8 [shape = 'u8[655360]{0}', space=vmem, size = 0xa0000, scoped, tag = 'input window, operand 2, single buffered']
    #allocation9 [shape = 'u8[1024]{0}', space=vmem, size = 0x400, scoped, tag = 'output window, operand 0']
    %8 = vsyncpa [#allocation4], 0
    %s9 = scalar_lea.sflag [#allocation4], 1
    %10 = vsyncpa %s9, 0
    %11 = vsyncpa [#allocation7], 0
    %12 = vsyncpa [#allocation5], 0
    %s13 = scalar_lea.sflag [#allocation5], 1
    %14 = vsyncpa %s13, 0
    loop: start=0, step=1, limit=6
    $region2: #{tpu_custom_call.1} parent=1 // loop_pre_header
      _
    $region3: #{tpu_custom_call.1} parent=1 // loop_header
      %s16 = sphi 0, %s20
      %p17 = scmp.ge.s32.totalorder %s16, 6
      %s23 = sphi 0, %s35
      %s24 = sphi 0, %s31
      %s25 = sphi 0, %s23
      %s26 = sphi 0, %s24
      %s27 = sphi 0, %s25
      %s28 = sphi 0, %s26
      %s40 = sphi 0, %s42
      %s43 = sphi 0, %s40
      %s44 = sphi 0, %s43
      %s60 = sphi 0, %s44
      %s64 = sphi 0, %s64
      %s66 = sphi 0, %s64
      %s67 = sphi 0, %s66
      %s81 = sphi 0, %s67
      %s85 = sphi 0, %s85
      %s87 = sphi 0, %s85
      %s88 = sphi 0, %s87
      %s102 = sphi 0, %s88
      %s108 = sphi 0, %s110
      %s111 = sphi 0, %s108
      %s112 = sphi 0, %s111
      %s128 = sphi 0, %s112
    $region4: #{tpu_custom_call.1} parent=1 // loop_header_branch
      %19 = sbr.rel (%p17) target = $region8
    $region5: #{tpu_custom_call.1} parent=1 // loop_body
      %s21 = ssub.s32 %s16, 1
      %s22 = ssub.s32 %s16, 2
      %s29 = sadd.s32 1, %s24
      %p30 = scmp.ge.s32.totalorder %s29, 2
      %s31 = scalar_select %p30, 0, %s29
      %s32 = sadd.s32 1, %s23
      %s33 = scalar_select %p30, %s32, %s23
      %p34 = scmp.ge.s32.totalorder %s33, 2
      %s35 = scalar_select %p34, 0, %s33
      %s36 = ssub.s32 %s23, %s35
      %s37 = ssub.s32 %s24, %s31
      %s38 = sor.u32 %s36, %s37
      %p39 = scmp.eq.s32.totalorder %s38, 0
      %s41 = sadd.s32 %s40, 1
      %s42 = scalar_select %p39, %s40, %s41
      %p45 = pneg %p39
      %p46 = scmp.eq.s32.totalorder %s16, 3
      %p47 = por %p45, %p46
      %p48 = scmp.ne.s32.totalorder %s40, %s43
      %p49 = scmp.eq.s32.totalorder %s16, 0
      %p50 = por %p48, %p49
      %p51 = scmp.ne.s32.totalorder %s40, %s43
      %p52 = scmp.eq.s32.totalorder %s21, 3
      %p53 = por %p51, %p52
      %p54 = scmp.ne.s32.totalorder %s43, %s44
      %p55 = scmp.eq.s32.totalorder %s21, 0
      %p56 = por %p54, %p55
      %p57 = scmp.ne.s32.totalorder %s43, %s44
      %p58 = scmp.eq.s32.totalorder %s22, 3
      %p59 = por %p57, %p58
      %p61 = scmp.ne.s32.totalorder %s44, %s60
      %p62 = scmp.eq.s32.totalorder %s22, 0
      %p63 = por %p61, %p62
      %s65 = sadd.s32 %s64, 1
      %p68 = scmp.eq.s32.totalorder %s16, 3
      %p69 = scmp.ne.s32.totalorder %s64, %s66
      %p70 = scmp.eq.s32.totalorder %s16, 0
      %p71 = por %p69, %p70
      %p72 = scmp.ne.s32.totalorder %s64, %s66
      %p73 = scmp.eq.s32.totalorder %s21, 3
      %p74 = por %p72, %p73
      %p75 = scmp.ne.s32.totalorder %s66, %s67
      %p76 = scmp.eq.s32.totalorder %s21, 0
      %p77 = por %p75, %p76
      %p78 = scmp.ne.s32.totalorder %s66, %s67
      %p79 = scmp.eq.s32.totalorder %s22, 3
      %p80 = por %p78, %p79
      %p82 = scmp.ne.s32.totalorder %s67, %s81
      %p83 = scmp.eq.s32.totalorder %s22, 0
      %p84 = por %p82, %p83
      %s86 = sadd.s32 %s85, 1
      %p89 = scmp.eq.s32.totalorder %s16, 3
      %p90 = scmp.ne.s32.totalorder %s85, %s87
      %p91 = scmp.eq.s32.totalorder %s16, 0
      %p92 = por %p90, %p91
      %p93 = scmp.ne.s32.totalorder %s85, %s87
      %p94 = scmp.eq.s32.totalorder %s21, 3
      %p95 = por %p93, %p94
      %p96 = scmp.ne.s32.totalorder %s87, %s88
      %p97 = scmp.eq.s32.totalorder %s21, 0
      %p98 = por %p96, %p97
      %p99 = scmp.ne.s32.totalorder %s87, %s88
      %p100 = scmp.eq.s32.totalorder %s22, 3
      %p101 = por %p99, %p100
      %p103 = scmp.ne.s32.totalorder %s88, %s102
      %p104 = scmp.eq.s32.totalorder %s22, 0
      %p105 = por %p103, %p104
      %s106 = ssub.s32 %s23, %s35
      %p107 = scmp.eq.s32.totalorder %s106, 0
      %s109 = sadd.s32 %s108, 1
      %s110 = scalar_select %p107, %s108, %s109
      %p113 = pneg %p107
      %p114 = scmp.eq.s32.totalorder %s16, 3
      %p115 = por %p113, %p114
      %p116 = scmp.ne.s32.totalorder %s108, %s111
      %p117 = scmp.eq.s32.totalorder %s16, 0
      %p118 = por %p116, %p117
      %p119 = scmp.ne.s32.totalorder %s108, %s111
      %p120 = scmp.eq.s32.totalorder %s21, 3
      %p121 = por %p119, %p120
      %p122 = scmp.ne.s32.totalorder %s111, %s112
      %p123 = scmp.eq.s32.totalorder %s21, 0
      %p124 = por %p122, %p123
      %p125 = scmp.ne.s32.totalorder %s111, %s112
      %p126 = scmp.eq.s32.totalorder %s22, 3
      %p127 = por %p125, %p126
      %p129 = scmp.ne.s32.totalorder %s112, %s128
      %p130 = scmp.eq.s32.totalorder %s22, 0
      %p131 = por %p129, %p130
      %p132 = scmp.le.s32.totalorder 1, %s16
      %p133 = scmp.lt.s32.totalorder %s16, 5
      %p134 = pnand %p132, %p133
      %p135 = pneg %p134
      // Predicated region
      $region9: #{tpu_custom_call.1} parent=5 // pred_check
        _
      $region10: #{tpu_custom_call.1} parent=5 // pred_check_branch
        %137 = sbr.rel (%p134) target = $region12
      $region11: #{tpu_custom_call.1} parent=5 // pred_region
        %s138 = ssub.s32 %s16, 1
        // Predicated region
        $region13: #{tpu_custom_call.1} parent=11 // pred_check
          %p139 = pneg %p77
        $region14: #{tpu_custom_call.1} parent=11 // pred_check_branch
          %141 = sbr.rel (%p139) target = $region16
        $region15: #{tpu_custom_call.1} parent=11 // pred_region
          %s143 = ssub.s32 640, 640
          %144 = vsyncadd [#allocation7], %s143
          %s146 = sshll.u32 [#allocation6], 4
          %s147 = int_to_ptr.vmem [resolvable:$true] %s146
          %149 = dma.hbm_to_vmem [thread:$0]  %s1, 640, %s147, [#allocation7]
        $region16: #{tpu_custom_call.1} parent=11 // pred_fallthru
          _
        // Predicated region
        $region17: #{tpu_custom_call.1} parent=11 // pred_check
          %p150 = pneg %p98
        $region18: #{tpu_custom_call.1} parent=11 // pred_check_branch
          %152 = sbr.rel (%p150) target = $region20
        $region19: #{tpu_custom_call.1} parent=11 // pred_region
          %s154 = ssub.s32 20480, 20480
          %155 = vsyncadd [#allocation7], %s154
          %s156 = sshll.u32 [#allocation8], 4
          %s157 = int_to_ptr.vmem [resolvable:$true] %s156
          %162 = dma.hbm_to_vmem [thread:$0]  %s2, 20480, %s157, [#allocation7], 128, 128, 8
        $region20: #{tpu_custom_call.1} parent=11 // pred_fallthru
          _
      $region12: #{tpu_custom_call.1} parent=5 // pred_fallthru
        _
      %p163 = scmp.lt.s32.totalorder %s16, 4
      // Predicated region
      $region21: #{tpu_custom_call.1} parent=5 // pred_check
        %p164 = pneg %p163
      $region22: #{tpu_custom_call.1} parent=5 // pred_check_branch
        %166 = sbr.rel (%p164) target = $region24
      $region23: #{tpu_custom_call.1} parent=5 // pred_region
        // Predicated region
        $region25: #{tpu_custom_call.1} parent=23 // pred_check
          %p167 = pneg %p50
        $region26: #{tpu_custom_call.1} parent=23 // pred_check_branch
          %169 = sbr.rel (%p167) target = $region28
        $region27: #{tpu_custom_call.1} parent=23 // pred_region
          %s170 = sand.u32 %s40, 1
          %s171 = scalar_lea.sflag [#allocation4], %s170
          %s172 = sand.u32 %s40, 1
          %s173 = smul.addr %s172, 8
          %s174 = scalar_lea.vmem [#allocation3], %s173
          %s176 = ssub.s32 128, 128
          %177 = vsyncadd %s171, %s176
          %s178 = smul.addr %s23, 2
          %s179 = sadd.s32 %s24, %s178
          %s180 = smul.addr %s179, 128
          %s181 = scalar_lea.hbm %s0, %s180
          %s183 = sshll.u32 %s174, 4
          %s184 = int_to_ptr.vmem [resolvable:$true] %s183
          %186 = dma.hbm_to_vmem [thread:$0]  %s181, 128, %s184, %s171
        $region28: #{tpu_custom_call.1} parent=23 // pred_fallthru
          _
      $region24: #{tpu_custom_call.1} parent=5 // pred_fallthru
        _
      %p187 = scmp.le.s32.totalorder 1, %s16
      %p188 = scmp.lt.s32.totalorder %s16, 5
      %p189 = pnand %p187, %p188
      %p190 = pneg %p189
      // Predicated region
      $region29: #{tpu_custom_call.1} parent=5 // pred_check
        _
      $region30: #{tpu_custom_call.1} parent=5 // pred_check_branch
        %192 = sbr.rel (%p189) target = $region32
      $region31: #{tpu_custom_call.1} parent=5 // pred_region
        %s193 = ssub.s32 %s16, 1
        %s194 = sand.u32 %s43, 1
        %s195 = scalar_lea.sflag [#allocation4], %s194
        %s196 = sand.u32 %s43, 1
        %s197 = smul.addr %s196, 8
        %s198 = scalar_lea.vmem [#allocation3], %s197
        // Predicated region
        $region33: #{tpu_custom_call.1} parent=31 // pred_check
          %p199 = pneg %p56
        $region34: #{tpu_custom_call.1} parent=31 // pred_check_branch
          %201 = sbr.rel (%p199) target = $region36
        $region35: #{tpu_custom_call.1} parent=31 // pred_region
          %202 = dma.done %s195, 128
        $region36: #{tpu_custom_call.1} parent=31 // pred_fallthru
          _
        // Predicated region
        $region37: #{tpu_custom_call.1} parent=31 // pred_check
          %p203 = pneg %p77
        $region38: #{tpu_custom_call.1} parent=31 // pred_check_branch
          %205 = sbr.rel (%p203) target = $region40
        $region39: #{tpu_custom_call.1} parent=31 // pred_region
          %206 = dma.done [#allocation7], 640
        $region40: #{tpu_custom_call.1} parent=31 // pred_fallthru
          _
        // Predicated region
        $region41: #{tpu_custom_call.1} parent=31 // pred_check
          %p207 = pneg %p98
        $region42: #{tpu_custom_call.1} parent=31 // pred_check_branch
          %209 = sbr.rel (%p207) target = $region44
        $region43: #{tpu_custom_call.1} parent=31 // pred_region
          %210 = dma.done [#allocation7], 20480
        $region44: #{tpu_custom_call.1} parent=31 // pred_fallthru
          _
        %s211 = sand.u32 %s43, 1
        %s212 = scalar_lea.sflag [#allocation4], %s211
        %s213 = sand.u32 %s43, 1
        %s214 = smul.addr %s213, 8
        %s215 = scalar_lea.vmem [#allocation3], %s214
        %p216 = pneg %p56
        %p217 = pneg %p53
        %p218 = pneg %p77
        %p219 = pneg %p74
        %p220 = pneg %p98
        %p221 = pneg %p95
        %p222 = pneg %p124
        %p223 = pneg %p121
        %s224 = sand.u32 %s111, 1
        %s225 = scalar_lea.sflag [#allocation5], %s224
        %s226 = sand.u32 %s111, 1
        %s227 = scalar_lea.vmem [#allocation9], %s226
        %p229 = scmp.eq.s32.totalorder %s26, 0
        // Predicated region
        $region45: #{tpu_custom_call.1} parent=31 // pred_check
          %p230 = pneg %p229
        $region46: #{tpu_custom_call.1} parent=31 // pred_check_branch
          %232 = sbr.rel (%p230) target = $region48
        $region47: #{tpu_custom_call.1} parent=31 // pred_region
          %233 = vst [vmem:[#allocation2] sm:$0xff] 0.0
          %v234 = vlaneseq
          %vm235 = vcmp.ge.s32.totalorder %v234, 0
          %vm236 = vcmp.lt.s32.totalorder %v234, 256
          %vm237 = vmand %vm235, %vm236
          %238 = vst.msk [vmem:[#allocation2 + $0x8] sm:$0x3] %vm237, 0.0
        $region48: #{tpu_custom_call.1} parent=31 // pred_fallthru
          _
        %v239 = vld [vmem:[%s198] sm:$0xff]
        %240 = vxpose.xlu0.b32.start [1/16] %v239, 128
        %241 = vxpose.xlu0.b32.cont [2/16] 0.0, 128
        %242 = vxpose.xlu0.b32.cont [3/16] 0.0, 128
        %243 = vxpose.xlu0.b32.cont [4/16] 0.0, 128
        %244 = vxpose.xlu0.b32.cont [5/16] 0.0, 128
        %245 = vxpose.xlu0.b32.cont [6/16] 0.0, 128
        %246 = vxpose.xlu0.b32.cont [7/16] 0.0, 128
        %247 = vxpose.xlu0.b32.cont [8/16] 0.0, 128
        %248 = vxpose.xlu0.b32.cont [9/16] 0.0, 128
        %249 = vxpose.xlu0.b32.cont [10/16] 0.0, 128
        %250 = vxpose.xlu0.b32.cont [11/16] 0.0, 128
        %251 = vxpose.xlu0.b32.cont [12/16] 0.0, 128
        %252 = vxpose.xlu0.b32.cont [13/16] 0.0, 128
        %253 = vxpose.xlu0.b32.cont [14/16] 0.0, 128
        %254 = vxpose.xlu0.b32.cont [15/16] 0.0, 128
        %255 = vxpose.xlu0.b32.end [16/16] 0.0, 128
        %v256 = vpop.trf.xlu0
        %v257 = vpop.trf.xlu0
        %v258 = vpop.trf.xlu0
        %v259 = vpop.trf.xlu0
        %v260 = vpop.trf.xlu0
        %v261 = vpop.trf.xlu0
        %v262 = vpop.trf.xlu0
        %v263 = vpop.trf.xlu0
        %v264 = vpop.trf.xlu0
        %v265 = vpop.trf.xlu0
        %v266 = vpop.trf.xlu0
        %v267 = vpop.trf.xlu0
        %v268 = vpop.trf.xlu0
        %v269 = vpop.trf.xlu0
        %v270 = vpop.trf.xlu0
        %v271 = vpop.trf.xlu0
        %v272 = vpack.c.bf16 %v257, %v256
        %v273 = vpack.c.bf16 %v259, %v258
        %v274 = vpack.c.bf16 %v261, %v260
        %v275 = vpack.c.bf16 %v263, %v262
        %v276 = vpack.c.bf16 %v265, %v264
        %v277 = vpack.c.bf16 %v267, %v266
        %v278 = vpack.c.bf16 %v269, %v268
        %v279 = vpack.c.bf16 %v271, %v270
        %v280 = vld [vmem:[#allocation6] sm:$0xff]
        %v281 = vld [vmem:[#allocation6 + $0x8] sm:$0xff]
        %v282 = vld [vmem:[#allocation6 + $0x10] sm:$0xff]
        %v283 = vld [vmem:[#allocation6 + $0x18] sm:$0xff]
        %v284 = vld [vmem:[#allocation6 + $0x20] sm:$0xff]
        %v290 = vunpack.c.l.b16 %v280
        %v291 = vunpack.c.h.b16 %v280
        %v292 = vunpack.c.l.b16 %v281
        %v293 = vunpack.c.h.b16 %v281
        %v294 = vunpack.c.l.b16 %v282
        %v295 = vunpack.c.h.b16 %v282
        %v296 = vunpack.c.l.b16 %v283
        %v297 = vunpack.c.h.b16 %v283
        %v298 = vunpack.c.l.b16 %v284
        %v299 = vunpack.c.h.b16 %v284
        %v300 = vpack.c.b16 %v290, %v290
        %v301 = vpack.c.b16 %v291, %v291
        %v302 = vpack.c.b16 %v292, %v292
        %v303 = vpack.c.b16 %v293, %v293
        %v304 = vpack.c.b16 %v294, %v294
        %v305 = vpack.c.b16 %v295, %v295
        %v306 = vpack.c.b16 %v296, %v296
        %v307 = vpack.c.b16 %v297, %v297
        %v308 = vpack.c.b16 %v298, %v298
        %v309 = vpack.c.b16 %v299, %v299
        %vm310 = vcmask 64512
        %v312 = vsel %vm310, %v272, 0
        %v315 = vsel %vm310, %v273, 0
        %v318 = vsel %vm310, %v274, 0
        %v321 = vsel %vm310, %v275, 0
        %v324 = vsel %vm310, %v276, 0
        %v327 = vsel %vm310, %v277, 0
        %v330 = vsel %vm310, %v278, 0
        %v333 = vsel %vm310, %v279, 0
        %vm335 = vcmask 1043456
        %v337 = vsel %vm335, %v300, 0
        %v340 = vsel %vm335, %v301, 0
        %v343 = vsel %vm335, %v302, 0
        %v346 = vsel %vm335, %v303, 0
        %v349 = vsel %vm335, %v304, 0
        %v352 = vsel %vm335, %v305, 0
        %v355 = vsel %vm335, %v306, 0
        %v358 = vsel %vm335, %v307, 0
        %v361 = vsel %vm335, %v308, 0
        %v364 = vsel %vm335, %v309, 0
        %366 = vmatprep.subr.bf16.mxu0 0
        %367 = vmatpush1.bf16.msra.mxu0 0
        %368 = vmatprep.subr.bf16.mxu0 0
        %369 = vmatpush1.bf16.msra.mxu0 0
        %370 = vmatprep.subr.bf16.mxu0 0
        %371 = vmatpush1.bf16.msra.mxu0 0
        %372 = vmatprep.subr.bf16.mxu0 0
        %373 = vmatpush1.bf16.msra.mxu0 0
        %374 = vmatprep.subr.bf16.mxu0 0
        %375 = vmatpush1.bf16.msra.mxu0 0
        %376 = vmatprep.subr.bf16.mxu0 0
        %377 = vmatpush1.bf16.msra.mxu0 0
        %378 = vmatprep.subr.bf16.mxu0 0
        %379 = vmatpush1.bf16.msra.mxu0 0
        %380 = vmatprep.subr.bf16.mxu0 %v340
        %381 = vmatpush1.bf16.msra.mxu0 %v337
        %382 = vmatprep.subr.bf16.mxu0 0
        %383 = vmatpush2.bf16.msra.mxu0 0
        %384 = vmatprep.subr.bf16.mxu0 0
        %385 = vmatpush2.bf16.msra.mxu0 0
        %386 = vmatprep.subr.bf16.mxu0 0
        %387 = vmatpush2.bf16.msra.mxu0 0
        %388 = vmatprep.subr.bf16.mxu0 0
        %389 = vmatpush2.bf16.msra.mxu0 0
        %390 = vmatprep.subr.bf16.mxu0 0
        %391 = vmatpush2.bf16.msra.mxu0 0
        %392 = vmatprep.subr.bf16.mxu0 0
        %393 = vmatpush2.bf16.msra.mxu0 0
        %394 = vmatprep.subr.bf16.mxu0 0
        %395 = vmatpush2.bf16.msra.mxu0 0
        %396 = vmatprep.subr.bf16.mxu0 0
        %397 = vmatpush2.bf16.msra.mxu0 0
        %398 = vmatprep.mubr.bf16.mxu0 0
        %399 = vmatmul.mubr.bf16.gmra.mxu0 %v312
        %v400 = vpop.f32.mrf.mxu0
        %v401 = vadd.f32 0.0, %v400
        %v402 = vpop.f32.mrf.mxu0
        %v403 = vadd.f32 0.0, %v402
        %v404 = vpop.f32.mrf.mxu0
        %v405 = vadd.f32 0.0, %v404
        %v406 = vpop.f32.mrf.mxu0
        %v407 = vadd.f32 0.0, %v406
        %408 = vmatprep.mubr.bf16.mxu0 0
        %409 = vmatmul.mubr.bf16.gmra.mxu0 %v315
        %v410 = vpop.f32.mrf.mxu0
        %v411 = vadd.f32 0.0, %v410
        %v412 = vpop.f32.mrf.mxu0
        %v413 = vadd.f32 0.0, %v412
        %v414 = vpop.f32.mrf.mxu0
        %v415 = vadd.f32 0.0, %v414
        %v416 = vpop.f32.mrf.mxu0
        %v417 = vadd.f32 0.0, %v416
        %418 = vmatprep.mubr.bf16.mxu0 0
        %419 = vmatmul.mubr.bf16.gmra.mxu0 %v318
        %v420 = vpop.f32.mrf.mxu0
        %v421 = vadd.f32 0.0, %v420
        %v422 = vpop.f32.mrf.mxu0
        %v423 = vadd.f32 0.0, %v422
        %v424 = vpop.f32.mrf.mxu0
        %v425 = vadd.f32 0.0, %v424
        %v426 = vpop.f32.mrf.mxu0
        %v427 = vadd.f32 0.0, %v426
        %428 = vmatprep.mubr.bf16.mxu0 0
        %429 = vmatmul.mubr.bf16.gmra.mxu0 %v321
        %v430 = vpop.f32.mrf.mxu0
        %v431 = vadd.f32 0.0, %v430
        %v432 = vpop.f32.mrf.mxu0
        %v433 = vadd.f32 0.0, %v432
        %v434 = vpop.f32.mrf.mxu0
        %v435 = vadd.f32 0.0, %v434
        %v436 = vpop.f32.mrf.mxu0
        %v437 = vadd.f32 0.0, %v436
        %438 = vmatprep.mubr.bf16.mxu0 0
        %439 = vmatmul.mubr.bf16.gmra.mxu0 %v324
        %v440 = vpop.f32.mrf.mxu0
        %v441 = vadd.f32 0.0, %v440
        %v442 = vpop.f32.mrf.mxu0
        %v443 = vadd.f32 0.0, %v442
        %v444 = vpop.f32.mrf.mxu0
        %v445 = vadd.f32 0.0, %v444
        %v446 = vpop.f32.mrf.mxu0
        %v447 = vadd.f32 0.0, %v446
        %448 = vmatprep.mubr.bf16.mxu0 0
        %449 = vmatmul.mubr.bf16.gmra.mxu0 %v327
        %v450 = vpop.f32.mrf.mxu0
        %v451 = vadd.f32 0.0, %v450
        %v452 = vpop.f32.mrf.mxu0
        %v453 = vadd.f32 0.0, %v452
        %v454 = vpop.f32.mrf.mxu0
        %v455 = vadd.f32 0.0, %v454
        %v456 = vpop.f32.mrf.mxu0
        %v457 = vadd.f32 0.0, %v456
        %458 = vmatprep.mubr.bf16.mxu0 0
        %459 = vmatmul.mubr.bf16.gmra.mxu0 %v330
        %v460 = vpop.f32.mrf.mxu0
        %v461 = vadd.f32 0.0, %v460
        %v462 = vpop.f32.mrf.mxu0
        %v463 = vadd.f32 0.0, %v462
        %v464 = vpop.f32.mrf.mxu0
        %v465 = vadd.f32 0.0, %v464
        %v466 = vpop.f32.mrf.mxu0
        %v467 = vadd.f32 0.0, %v466
        %468 = vmatprep.mubr.bf16.mxu0 0
        %469 = vmatmul.mubr.bf16.gmra.mxu0 %v333
        %v470 = vpop.f32.mrf.mxu0
        %v471 = vadd.f32 0.0, %v470
        %v472 = vpop.f32.mrf.mxu0
        %v473 = vadd.f32 0.0, %v472
        %v474 = vpop.f32.mrf.mxu0
        %v475 = vadd.f32 0.0, %v474
        %v476 = vpop.f32.mrf.mxu0
        %v477 = vadd.f32 0.0, %v476
        %478 = vdwg.mxu0
        %479 = vmatprep.subr.bf16.mxu0 0
        %480 = vmatpush1.bf16.msra.mxu0 0
        %481 = vmatprep.subr.bf16.mxu0 0
        %482 = vmatpush1.bf16.msra.mxu0 0
        %483 = vmatprep.subr.bf16.mxu0 0
        %484 = vmatpush1.bf16.msra.mxu0 0
        %485 = vmatprep.subr.bf16.mxu0 0
        %486 = vmatpush1.bf16.msra.mxu0 0
        %487 = vmatprep.subr.bf16.mxu0 0
        %488 = vmatpush1.bf16.msra.mxu0 0
        %489 = vmatprep.subr.bf16.mxu0 0
        %490 = vmatpush1.bf16.msra.mxu0 0
        %491 = vmatprep.subr.bf16.mxu0 0
        %492 = vmatpush1.bf16.msra.mxu0 0
        %493 = vmatprep.subr.bf16.mxu0 %v346
        %494 = vmatpush1.bf16.msra.mxu0 %v343
        %495 = vmatprep.subr.bf16.mxu0 0
        %496 = vmatpush2.bf16.msra.mxu0 0
        %497 = vmatprep.subr.bf16.mxu0 0
        %498 = vmatpush2.bf16.msra.mxu0 0
        %499 = vmatprep.subr.bf16.mxu0 0
        %500 = vmatpush2.bf16.msra.mxu0 0
        %501 = vmatprep.subr.bf16.mxu0 0
        %502 = vmatpush2.bf16.msra.mxu0 0
        %503 = vmatprep.subr.bf16.mxu0 0
        %504 = vmatpush2.bf16.msra.mxu0 0
        %505 = vmatprep.subr.bf16.mxu0 0
        %506 = vmatpush2.bf16.msra.mxu0 0
        %507 = vmatprep.subr.bf16.mxu0 0
        %508 = vmatpush2.bf16.msra.mxu0 0
        %509 = vmatprep.subr.bf16.mxu0 0
        %510 = vmatpush2.bf16.msra.mxu0 0
        %511 = vmatprep.mubr.bf16.mxu0 0
        %512 = vmatmul.mubr.bf16.gmra.mxu0 %v312
        %v513 = vpop.f32.mrf.mxu0
        %v514 = vadd.f32 0.0, %v513
        %v515 = vpop.f32.mrf.mxu0
        %v516 = vadd.f32 0.0, %v515
        %v517 = vpop.f32.mrf.mxu0
        %v518 = vadd.f32 0.0, %v517
        %v519 = vpop.f32.mrf.mxu0
        %v520 = vadd.f32 0.0, %v519
        %521 = vmatprep.mubr.bf16.mxu0 0
        %522 = vmatmul.mubr.bf16.gmra.mxu0 %v315
        %v523 = vpop.f32.mrf.mxu0
        %v524 = vadd.f32 0.0, %v523
        %v525 = vpop.f32.mrf.mxu0
        %v526 = vadd.f32 0.0, %v525
        %v527 = vpop.f32.mrf.mxu0
        %v528 = vadd.f32 0.0, %v527
        %v529 = vpop.f32.mrf.mxu0
        %v530 = vadd.f32 0.0, %v529
        %531 = vmatprep.mubr.bf16.mxu0 0
        %532 = vmatmul.mubr.bf16.gmra.mxu0 %v318
        %v533 = vpop.f32.mrf.mxu0
        %v534 = vadd.f32 0.0, %v533
        %v535 = vpop.f32.mrf.mxu0
        %v536 = vadd.f32 0.0, %v535
        %v537 = vpop.f32.mrf.mxu0
        %v538 = vadd.f32 0.0, %v537
        %v539 = vpop.f32.mrf.mxu0
        %v540 = vadd.f32 0.0, %v539
        %541 = vmatprep.mubr.bf16.mxu0 0
        %542 = vmatmul.mubr.bf16.gmra.mxu0 %v321
        %v543 = vpop.f32.mrf.mxu0
        %v544 = vadd.f32 0.0, %v543
        %v545 = vpop.f32.mrf.mxu0
        %v546 = vadd.f32 0.0, %v545
        %v547 = vpop.f32.mrf.mxu0
        %v548 = vadd.f32 0.0, %v547
        %v549 = vpop.f32.mrf.mxu0
        %v550 = vadd.f32 0.0, %v549
        %551 = vmatprep.mubr.bf16.mxu0 0
        %552 = vmatmul.mubr.bf16.gmra.mxu0 %v324
        %v553 = vpop.f32.mrf.mxu0
        %v554 = vadd.f32 0.0, %v553
        %v555 = vpop.f32.mrf.mxu0
        %v556 = vadd.f32 0.0, %v555
        %v557 = vpop.f32.mrf.mxu0
        %v558 = vadd.f32 0.0, %v557
        %v559 = vpop.f32.mrf.mxu0
        %v560 = vadd.f32 0.0, %v559
        %561 = vmatprep.mubr.bf16.mxu0 0
        %562 = vmatmul.mubr.bf16.gmra.mxu0 %v327
        %v563 = vpop.f32.mrf.mxu0
        %v564 = vadd.f32 0.0, %v563
        %v565 = vpop.f32.mrf.mxu0
        %v566 = vadd.f32 0.0, %v565
        %v567 = vpop.f32.mrf.mxu0
        %v568 = vadd.f32 0.0, %v567
        %v569 = vpop.f32.mrf.mxu0
        %v570 = vadd.f32 0.0, %v569
        %571 = vmatprep.mubr.bf16.mxu0 0
        %572 = vmatmul.mubr.bf16.gmra.mxu0 %v330
        %v573 = vpop.f32.mrf.mxu0
        %v574 = vadd.f32 0.0, %v573
        %v575 = vpop.f32.mrf.mxu0
        %v576 = vadd.f32 0.0, %v575
        %v577 = vpop.f32.mrf.mxu0
        %v578 = vadd.f32 0.0, %v577
        %v579 = vpop.f32.mrf.mxu0
        %v580 = vadd.f32 0.0, %v579
        %581 = vmatprep.mubr.bf16.mxu0 0
        %582 = vmatmul.mubr.bf16.gmra.mxu0 %v333
        %v583 = vpop.f32.mrf.mxu0
        %v584 = vadd.f32 0.0, %v583
        %v585 = vpop.f32.mrf.mxu0
        %v586 = vadd.f32 0.0, %v585
        %v587 = vpop.f32.mrf.mxu0
        %v588 = vadd.f32 0.0, %v587
        %v589 = vpop.f32.mrf.mxu0
        %v590 = vadd.f32 0.0, %v589
        %591 = vdwg.mxu0
        %592 = vmatprep.subr.bf16.mxu0 0
        %593 = vmatpush1.bf16.msra.mxu0 0
        %594 = vmatprep.subr.bf16.mxu0 0
        %595 = vmatpush1.bf16.msra.mxu0 0
        %596 = vmatprep.subr.bf16.mxu0 0
        %597 = vmatpush1.bf16.msra.mxu0 0
        %598 = vmatprep.subr.bf16.mxu0 0
        %599 = vmatpush1.bf16.msra.mxu0 0
        %600 = vmatprep.subr.bf16.mxu0 0
        %601 = vmatpush1.bf16.msra.mxu0 0
        %602 = vmatprep.subr.bf16.mxu0 0
        %603 = vmatpush1.bf16.msra.mxu0 0
        %604 = vmatprep.subr.bf16.mxu0 0
        %605 = vmatpush1.bf16.msra.mxu0 0
        %606 = vmatprep.subr.bf16.mxu0 %v352
        %607 = vmatpush1.bf16.msra.mxu0 %v349
        %608 = vmatprep.subr.bf16.mxu0 0
        %609 = vmatpush2.bf16.msra.mxu0 0
        %610 = vmatprep.subr.bf16.mxu0 0
        %611 = vmatpush2.bf16.msra.mxu0 0
        %612 = vmatprep.subr.bf16.mxu0 0
        %613 = vmatpush2.bf16.msra.mxu0 0
        %614 = vmatprep.subr.bf16.mxu0 0
        %615 = vmatpush2.bf16.msra.mxu0 0
        %616 = vmatprep.subr.bf16.mxu0 0
        %617 = vmatpush2.bf16.msra.mxu0 0
        %618 = vmatprep.subr.bf16.mxu0 0
        %619 = vmatpush2.bf16.msra.mxu0 0
        %620 = vmatprep.subr.bf16.mxu0 0
        %621 = vmatpush2.bf16.msra.mxu0 0
        %622 = vmatprep.subr.bf16.mxu0 0
        %623 = vmatpush2.bf16.msra.mxu0 0
        %624 = vmatprep.mubr.bf16.mxu0 0
        %625 = vmatmul.mubr.bf16.gmra.mxu0 %v312
        %v626 = vpop.f32.mrf.mxu0
        %v627 = vadd.f32 0.0, %v626
        %v628 = vpop.f32.mrf.mxu0
        %v629 = vadd.f32 0.0, %v628
        %v630 = vpop.f32.mrf.mxu0
        %v631 = vadd.f32 0.0, %v630
        %v632 = vpop.f32.mrf.mxu0
        %v633 = vadd.f32 0.0, %v632
        %634 = vmatprep.mubr.bf16.mxu0 0
        %635 = vmatmul.mubr.bf16.gmra.mxu0 %v315
        %v636 = vpop.f32.mrf.mxu0
        %v637 = vadd.f32 0.0, %v636
        %v638 = vpop.f32.mrf.mxu0
        %v639 = vadd.f32 0.0, %v638
        %v640 = vpop.f32.mrf.mxu0
        %v641 = vadd.f32 0.0, %v640
        %v642 = vpop.f32.mrf.mxu0
        %v643 = vadd.f32 0.0, %v642
        %644 = vmatprep.mubr.bf16.mxu0 0
        %645 = vmatmul.mubr.bf16.gmra.mxu0 %v318
        %v646 = vpop.f32.mrf.mxu0
        %v647 = vadd.f32 0.0, %v646
        %v648 = vpop.f32.mrf.mxu0
        %v649 = vadd.f32 0.0, %v648
        %v650 = vpop.f32.mrf.mxu0
        %v651 = vadd.f32 0.0, %v650
        %v652 = vpop.f32.mrf.mxu0
        %v653 = vadd.f32 0.0, %v652
        %654 = vmatprep.mubr.bf16.mxu0 0
        %655 = vmatmul.mubr.bf16.gmra.mxu0 %v321
        %v656 = vpop.f32.mrf.mxu0
        %v657 = vadd.f32 0.0, %v656
        %v658 = vpop.f32.mrf.mxu0
        %v659 = vadd.f32 0.0, %v658
        %v660 = vpop.f32.mrf.mxu0
        %v661 = vadd.f32 0.0, %v660
        %v662 = vpop.f32.mrf.mxu0
        %v663 = vadd.f32 0.0, %v662
        %664 = vmatprep.mubr.bf16.mxu0 0
        %665 = vmatmul.mubr.bf16.gmra.mxu0 %v324
        %v666 = vpop.f32.mrf.mxu0
        %v667 = vadd.f32 0.0, %v666
        %v668 = vpop.f32.mrf.mxu0
        %v669 = vadd.f32 0.0, %v668
        %v670 = vpop.f32.mrf.mxu0
        %v671 = vadd.f32 0.0, %v670
        %v672 = vpop.f32.mrf.mxu0
        %v673 = vadd.f32 0.0, %v672
        %674 = vmatprep.mubr.bf16.mxu0 0
        %675 = vmatmul.mubr.bf16.gmra.mxu0 %v327
        %v676 = vpop.f32.mrf.mxu0
        %v677 = vadd.f32 0.0, %v676
        %v678 = vpop.f32.mrf.mxu0
        %v679 = vadd.f32 0.0, %v678
        %v680 = vpop.f32.mrf.mxu0
        %v681 = vadd.f32 0.0, %v680
        %v682 = vpop.f32.mrf.mxu0
        %v683 = vadd.f32 0.0, %v682
        %684 = vmatprep.mubr.bf16.mxu0 0
        %685 = vmatmul.mubr.bf16.gmra.mxu0 %v330
        %v686 = vpop.f32.mrf.mxu0
        %v687 = vadd.f32 0.0, %v686
        %v688 = vpop.f32.mrf.mxu0
        %v689 = vadd.f32 0.0, %v688
        %v690 = vpop.f32.mrf.mxu0
        %v691 = vadd.f32 0.0, %v690
        %v692 = vpop.f32.mrf.mxu0
        %v693 = vadd.f32 0.0, %v692
        %694 = vmatprep.mubr.bf16.mxu0 0
        %695 = vmatmul.mubr.bf16.gmra.mxu0 %v333
        %v696 = vpop.f32.mrf.mxu0
        %v697 = vadd.f32 0.0, %v696
        %v698 = vpop.f32.mrf.mxu0
        %v699 = vadd.f32 0.0, %v698
        %v700 = vpop.f32.mrf.mxu0
        %v701 = vadd.f32 0.0, %v700
        %v702 = vpop.f32.mrf.mxu0
        %v703 = vadd.f32 0.0, %v702
        %704 = vdwg.mxu0
        %705 = vmatprep.subr.bf16.mxu0 0
        %706 = vmatpush1.bf16.msra.mxu0 0
        %707 = vmatprep.subr.bf16.mxu0 0
        %708 = vmatpush1.bf16.msra.mxu0 0
        %709 = vmatprep.subr.bf16.mxu0 0
        %710 = vmatpush1.bf16.msra.mxu0 0
        %711 = vmatprep.subr.bf16.mxu0 0
        %712 = vmatpush1.bf16.msra.mxu0 0
        %713 = vmatprep.subr.bf16.mxu0 0
        %714 = vmatpush1.bf16.msra.mxu0 0
        %715 = vmatprep.subr.bf16.mxu0 0
        %716 = vmatpush1.bf16.msra.mxu0 0
        %717 = vmatprep.subr.bf16.mxu0 0
        %718 = vmatpush1.bf16.msra.mxu0 0
        %719 = vmatprep.subr.bf16.mxu0 %v358
        %720 = vmatpush1.bf16.msra.mxu0 %v355
        %721 = vmatprep.subr.bf16.mxu0 0
        %722 = vmatpush2.bf16.msra.mxu0 0
        %723 = vmatprep.subr.bf16.mxu0 0
        %724 = vmatpush2.bf16.msra.mxu0 0
        %725 = vmatprep.subr.bf16.mxu0 0
        %726 = vmatpush2.bf16.msra.mxu0 0
        %727 = vmatprep.subr.bf16.mxu0 0
        %728 = vmatpush2.bf16.msra.mxu0 0
        %729 = vmatprep.subr.bf16.mxu0 0
        %730 = vmatpush2.bf16.msra.mxu0 0
        %731 = vmatprep.subr.bf16.mxu0 0
        %732 = vmatpush2.bf16.msra.mxu0 0
        %733 = vmatprep.subr.bf16.mxu0 0
        %734 = vmatpush2.bf16.msra.mxu0 0
        %735 = vmatprep.subr.bf16.mxu0 0
        %736 = vmatpush2.bf16.msra.mxu0 0
        %737 = vmatprep.mubr.bf16.mxu0 0
        %738 = vmatmul.mubr.bf16.gmra.mxu0 %v312
        %v739 = vpop.f32.mrf.mxu0
        %v740 = vadd.f32 0.0, %v739
        %v741 = vpop.f32.mrf.mxu0
        %v742 = vadd.f32 0.0, %v741
        %v743 = vpop.f32.mrf.mxu0
        %v744 = vadd.f32 0.0, %v743
        %v745 = vpop.f32.mrf.mxu0
        %v746 = vadd.f32 0.0, %v745
        %747 = vmatprep.mubr.bf16.mxu0 0
        %748 = vmatmul.mubr.bf16.gmra.mxu0 %v315
        %v749 = vpop.f32.mrf.mxu0
        %v750 = vadd.f32 0.0, %v749
        %v751 = vpop.f32.mrf.mxu0
        %v752 = vadd.f32 0.0, %v751
        %v753 = vpop.f32.mrf.mxu0
        %v754 = vadd.f32 0.0, %v753
        %v755 = vpop.f32.mrf.mxu0
        %v756 = vadd.f32 0.0, %v755
        %757 = vmatprep.mubr.bf16.mxu0 0
        %758 = vmatmul.mubr.bf16.gmra.mxu0 %v318
        %v759 = vpop.f32.mrf.mxu0
        %v760 = vadd.f32 0.0, %v759
        %v761 = vpop.f32.mrf.mxu0
        %v762 = vadd.f32 0.0, %v761
        %v763 = vpop.f32.mrf.mxu0
        %v764 = vadd.f32 0.0, %v763
        %v765 = vpop.f32.mrf.mxu0
        %v766 = vadd.f32 0.0, %v765
        %767 = vmatprep.mubr.bf16.mxu0 0
        %768 = vmatmul.mubr.bf16.gmra.mxu0 %v321
        %v769 = vpop.f32.mrf.mxu0
        %v770 = vadd.f32 0.0, %v769
        %v771 = vpop.f32.mrf.mxu0
        %v772 = vadd.f32 0.0, %v771
        %v773 = vpop.f32.mrf.mxu0
        %v774 = vadd.f32 0.0, %v773
        %v775 = vpop.f32.mrf.mxu0
        %v776 = vadd.f32 0.0, %v775
        %777 = vmatprep.mubr.bf16.mxu0 0
        %778 = vmatmul.mubr.bf16.gmra.mxu0 %v324
        %v779 = vpop.f32.mrf.mxu0
        %v780 = vadd.f32 0.0, %v779
        %v781 = vpop.f32.mrf.mxu0
        %v782 = vadd.f32 0.0, %v781
        %v783 = vpop.f32.mrf.mxu0
        %v784 = vadd.f32 0.0, %v783
        %v785 = vpop.f32.mrf.mxu0
        %v786 = vadd.f32 0.0, %v785
        %787 = vmatprep.mubr.bf16.mxu0 0
        %788 = vmatmul.mubr.bf16.gmra.mxu0 %v327
        %v789 = vpop.f32.mrf.mxu0
        %v790 = vadd.f32 0.0, %v789
        %v791 = vpop.f32.mrf.mxu0
        %v792 = vadd.f32 0.0, %v791
        %v793 = vpop.f32.mrf.mxu0
        %v794 = vadd.f32 0.0, %v793
        %v795 = vpop.f32.mrf.mxu0
        %v796 = vadd.f32 0.0, %v795
        %797 = vmatprep.mubr.bf16.mxu0 0
        %798 = vmatmul.mubr.bf16.gmra.mxu0 %v330
        %v799 = vpop.f32.mrf.mxu0
        %v800 = vadd.f32 0.0, %v799
        %v801 = vpop.f32.mrf.mxu0
        %v802 = vadd.f32 0.0, %v801
        %v803 = vpop.f32.mrf.mxu0
        %v804 = vadd.f32 0.0, %v803
        %v805 = vpop.f32.mrf.mxu0
        %v806 = vadd.f32 0.0, %v805
        %807 = vmatprep.mubr.bf16.mxu0 0
        %808 = vmatmul.mubr.bf16.gmra.mxu0 %v333
        %v809 = vpop.f32.mrf.mxu0
        %v810 = vadd.f32 0.0, %v809
        %v811 = vpop.f32.mrf.mxu0
        %v812 = vadd.f32 0.0, %v811
        %v813 = vpop.f32.mrf.mxu0
        %v814 = vadd.f32 0.0, %v813
        %v815 = vpop.f32.mrf.mxu0
        %v816 = vadd.f32 0.0, %v815
        %817 = vdwg.mxu0
        %818 = vmatprep.subr.bf16.mxu0 0
        %819 = vmatpush1.bf16.msra.mxu0 0
        %820 = vmatprep.subr.bf16.mxu0 0
        %821 = vmatpush1.bf16.msra.mxu0 0
        %822 = vmatprep.subr.bf16.mxu0 0
        %823 = vmatpush1.bf16.msra.mxu0 0
        %824 = vmatprep.subr.bf16.mxu0 0
        %825 = vmatpush1.bf16.msra.mxu0 0
        %826 = vmatprep.subr.bf16.mxu0 0
        %827 = vmatpush1.bf16.msra.mxu0 0
        %828 = vmatprep.subr.bf16.mxu0 0
        %829 = vmatpush1.bf16.msra.mxu0 0
        %830 = vmatprep.subr.bf16.mxu0 0
        %831 = vmatpush1.bf16.msra.mxu0 0
        %832 = vmatprep.subr.bf16.mxu0 %v364
        %833 = vmatpush1.bf16.msra.mxu0 %v361
        %834 = vmatprep.subr.bf16.mxu0 0
        %835 = vmatpush2.bf16.msra.mxu0 0
        %836 = vmatprep.subr.bf16.mxu0 0
        %837 = vmatpush2.bf16.msra.mxu0 0
        %838 = vmatprep.subr.bf16.mxu0 0
        %839 = vmatpush2.bf16.msra.mxu0 0
        %840 = vmatprep.subr.bf16.mxu0 0
        %841 = vmatpush2.bf16.msra.mxu0 0
        %842 = vmatprep.subr.bf16.mxu0 0
        %843 = vmatpush2.bf16.msra.mxu0 0
        %844 = vmatprep.subr.bf16.mxu0 0
        %845 = vmatpush2.bf16.msra.mxu0 0
        %846 = vmatprep.subr.bf16.mxu0 0
        %847 = vmatpush2.bf16.msra.mxu0 0
        %848 = vmatprep.subr.bf16.mxu0 0
        %849 = vmatpush2.bf16.msra.mxu0 0
        %850 = vmatprep.mubr.bf16.mxu0 0
        %851 = vmatmul.mubr.bf16.gmra.mxu0 %v312
        %v852 = vpop.f32.mrf.mxu0
        %v853 = vadd.f32 0.0, %v852
        %v854 = vpop.f32.mrf.mxu0
        %v855 = vadd.f32 0.0, %v854
        %v856 = vpop.f32.mrf.mxu0
        %v857 = vadd.f32 0.0, %v856
        %v858 = vpop.f32.mrf.mxu0
        %v859 = vadd.f32 0.0, %v858
        %860 = vmatprep.mubr.bf16.mxu0 0
        %861 = vmatmul.mubr.bf16.gmra.mxu0 %v315
        %v862 = vpop.f32.mrf.mxu0
        %v863 = vadd.f32 0.0, %v862
        %v864 = vpop.f32.mrf.mxu0
        %v865 = vadd.f32 0.0, %v864
        %v866 = vpop.f32.mrf.mxu0
        %v867 = vadd.f32 0.0, %v866
        %v868 = vpop.f32.mrf.mxu0
        %v869 = vadd.f32 0.0, %v868
        %870 = vmatprep.mubr.bf16.mxu0 0
        %871 = vmatmul.mubr.bf16.gmra.mxu0 %v318
        %v872 = vpop.f32.mrf.mxu0
        %v873 = vadd.f32 0.0, %v872
        %v874 = vpop.f32.mrf.mxu0
        %v875 = vadd.f32 0.0, %v874
        %v876 = vpop.f32.mrf.mxu0
        %v877 = vadd.f32 0.0, %v876
        %v878 = vpop.f32.mrf.mxu0
        %v879 = vadd.f32 0.0, %v878
        %880 = vmatprep.mubr.bf16.mxu0 0
        %881 = vmatmul.mubr.bf16.gmra.mxu0 %v321
        %v882 = vpop.f32.mrf.mxu0
        %v883 = vadd.f32 0.0, %v882
        %v884 = vpop.f32.mrf.mxu0
        %v885 = vadd.f32 0.0, %v884
        %v886 = vpop.f32.mrf.mxu0
        %v887 = vadd.f32 0.0, %v886
        %v888 = vpop.f32.mrf.mxu0
        %v889 = vadd.f32 0.0, %v888
        %890 = vmatprep.mubr.bf16.mxu0 0
        %891 = vmatmul.mubr.bf16.gmra.mxu0 %v324
        %v892 = vpop.f32.mrf.mxu0
        %v893 = vadd.f32 0.0, %v892
        %v894 = vpop.f32.mrf.mxu0
        %v895 = vadd.f32 0.0, %v894
        %v896 = vpop.f32.mrf.mxu0
        %v897 = vadd.f32 0.0, %v896
        %v898 = vpop.f32.mrf.mxu0
        %v899 = vadd.f32 0.0, %v898
        %900 = vmatprep.mubr.bf16.mxu0 0
        %901 = vmatmul.mubr.bf16.gmra.mxu0 %v327
        %v902 = vpop.f32.mrf.mxu0
        %v903 = vadd.f32 0.0, %v902
        %v904 = vpop.f32.mrf.mxu0
        %v905 = vadd.f32 0.0, %v904
        %v906 = vpop.f32.mrf.mxu0
        %v907 = vadd.f32 0.0, %v906
        %v908 = vpop.f32.mrf.mxu0
        %v909 = vadd.f32 0.0, %v908
        %910 = vmatprep.mubr.bf16.mxu0 0
        %911 = vmatmul.mubr.bf16.gmra.mxu0 %v330
        %v912 = vpop.f32.mrf.mxu0
        %v913 = vadd.f32 0.0, %v912
        %v914 = vpop.f32.mrf.mxu0
        %v915 = vadd.f32 0.0, %v914
        %v916 = vpop.f32.mrf.mxu0
        %v917 = vadd.f32 0.0, %v916
        %v918 = vpop.f32.mrf.mxu0
        %v919 = vadd.f32 0.0, %v918
        %920 = vmatprep.mubr.bf16.mxu0 0
        %921 = vmatmul.mubr.bf16.gmra.mxu0 %v333
        %v922 = vpop.f32.mrf.mxu0
        %v923 = vadd.f32 0.0, %v922
        %v924 = vpop.f32.mrf.mxu0
        %v925 = vadd.f32 0.0, %v924
        %v926 = vpop.f32.mrf.mxu0
        %v927 = vadd.f32 0.0, %v926
        %v928 = vpop.f32.mrf.mxu0
        %v929 = vadd.f32 0.0, %v928
        %930 = vdwg.mxu0
        %v931 = vsub.f32 0.0, %v401
        %v932 = vsub.f32 0.0, %v403
        %v933 = vsub.f32 0.0, %v514
        %v934 = vsub.f32 0.0, %v516
        %v935 = vsub.f32 0.0, %v627
        %v936 = vsub.f32 0.0, %v629
        %v937 = vsub.f32 0.0, %v740
        %v938 = vsub.f32 0.0, %v742
        %v939 = vsub.f32 0.0, %v853
        %v940 = vsub.f32 0.0, %v855
        %v941 = vsub.f32 0.0, %v405
        %v942 = vsub.f32 0.0, %v407
        %v943 = vsub.f32 0.0, %v518
        %v944 = vsub.f32 0.0, %v520
        %v945 = vsub.f32 0.0, %v631
        %v946 = vsub.f32 0.0, %v633
        %v947 = vsub.f32 0.0, %v744
        %v948 = vsub.f32 0.0, %v746
        %v949 = vsub.f32 0.0, %v857
        %v950 = vsub.f32 0.0, %v859
        %v951 = vsub.f32 0.0, %v411
        %v952 = vsub.f32 0.0, %v413
        %v953 = vsub.f32 0.0, %v524
        %v954 = vsub.f32 0.0, %v526
        %v955 = vsub.f32 0.0, %v637
        %v956 = vsub.f32 0.0, %v639
        %v957 = vsub.f32 0.0, %v750
        %v958 = vsub.f32 0.0, %v752
        %v959 = vsub.f32 0.0, %v863
        %v960 = vsub.f32 0.0, %v865
        %v961 = vsub.f32 0.0, %v415
        %v962 = vsub.f32 0.0, %v417
        %v963 = vsub.f32 0.0, %v528
        %v964 = vsub.f32 0.0, %v530
        %v965 = vsub.f32 0.0, %v641
        %v966 = vsub.f32 0.0, %v643
        %v967 = vsub.f32 0.0, %v754
        %v968 = vsub.f32 0.0, %v756
        %v969 = vsub.f32 0.0, %v867
        %v970 = vsub.f32 0.0, %v869
        %v971 = vsub.f32 0.0, %v421
        %v972 = vsub.f32 0.0, %v423
        %v973 = vsub.f32 0.0, %v534
        %v974 = vsub.f32 0.0, %v536
        %v975 = vsub.f32 0.0, %v647
        %v976 = vsub.f32 0.0, %v649
        %v977 = vsub.f32 0.0, %v760
        %v978 = vsub.f32 0.0, %v762
        %v979 = vsub.f32 0.0, %v873
        %v980 = vsub.f32 0.0, %v875
        %v981 = vsub.f32 0.0, %v425
        %v982 = vsub.f32 0.0, %v427
        %v983 = vsub.f32 0.0, %v538
        %v984 = vsub.f32 0.0, %v540
        %v985 = vsub.f32 0.0, %v651
        %v986 = vsub.f32 0.0, %v653
        %v987 = vsub.f32 0.0, %v764
        %v988 = vsub.f32 0.0, %v766
        %v989 = vsub.f32 0.0, %v877
        %v990 = vsub.f32 0.0, %v879
        %v991 = vsub.f32 0.0, %v431
        %v992 = vsub.f32 0.0, %v433
        %v993 = vsub.f32 0.0, %v544
        %v994 = vsub.f32 0.0, %v546
        %v995 = vsub.f32 0.0, %v657
        %v996 = vsub.f32 0.0, %v659
        %v997 = vsub.f32 0.0, %v770
        %v998 = vsub.f32 0.0, %v772
        %v999 = vsub.f32 0.0, %v883
        %v1000 = vsub.f32 0.0, %v885
        %v1001 = vsub.f32 0.0, %v435
        %v1002 = vsub.f32 0.0, %v437
        %v1003 = vsub.f32 0.0, %v548
        %v1004 = vsub.f32 0.0, %v550
        %v1005 = vsub.f32 0.0, %v661
        %v1006 = vsub.f32 0.0, %v663
        %v1007 = vsub.f32 0.0, %v774
        %v1008 = vsub.f32 0.0, %v776
        %v1009 = vsub.f32 0.0, %v887
        %v1010 = vsub.f32 0.0, %v889
        %v1011 = vsub.f32 0.0, %v441
        %v1012 = vsub.f32 0.0, %v443
        %v1013 = vsub.f32 0.0, %v554
        %v1014 = vsub.f32 0.0, %v556
        %v1015 = vsub.f32 0.0, %v667
        %v1016 = vsub.f32 0.0, %v669
        %v1017 = vsub.f32 0.0, %v780
        %v1018 = vsub.f32 0.0, %v782
        %v1019 = vsub.f32 0.0, %v893
        %v1020 = vsub.f32 0.0, %v895
        %v1021 = vsub.f32 0.0, %v445
        %v1022 = vsub.f32 0.0, %v447
        %v1023 = vsub.f32 0.0, %v558
        %v1024 = vsub.f32 0.0, %v560
        %v1025 = vsub.f32 0.0, %v671
        %v1026 = vsub.f32 0.0, %v673
        %v1027 = vsub.f32 0.0, %v784
        %v1028 = vsub.f32 0.0, %v786
        %v1029 = vsub.f32 0.0, %v897
        %v1030 = vsub.f32 0.0, %v899
        %v1031 = vsub.f32 0.0, %v451
        %v1032 = vsub.f32 0.0, %v453
        %v1033 = vsub.f32 0.0, %v564
        %v1034 = vsub.f32 0.0, %v566
        %v1035 = vsub.f32 0.0, %v677
        %v1036 = vsub.f32 0.0, %v679
        %v1037 = vsub.f32 0.0, %v790
        %v1038 = vsub.f32 0.0, %v792
        %v1039 = vsub.f32 0.0, %v903
        %v1040 = vsub.f32 0.0, %v905
        %v1041 = vsub.f32 0.0, %v455
        %v1042 = vsub.f32 0.0, %v457
        %v1043 = vsub.f32 0.0, %v568
        %v1044 = vsub.f32 0.0, %v570
        %v1045 = vsub.f32 0.0, %v681
        %v1046 = vsub.f32 0.0, %v683
        %v1047 = vsub.f32 0.0, %v794
        %v1048 = vsub.f32 0.0, %v796
        %v1049 = vsub.f32 0.0, %v907
        %v1050 = vsub.f32 0.0, %v909
        %v1051 = vsub.f32 0.0, %v461
        %v1052 = vsub.f32 0.0, %v463
        %v1053 = vsub.f32 0.0, %v574
        %v1054 = vsub.f32 0.0, %v576
        %v1055 = vsub.f32 0.0, %v687
        %v1056 = vsub.f32 0.0, %v689
        %v1057 = vsub.f32 0.0, %v800
        %v1058 = vsub.f32 0.0, %v802
        %v1059 = vsub.f32 0.0, %v913
        %v1060 = vsub.f32 0.0, %v915
        %v1061 = vsub.f32 0.0, %v465
        %v1062 = vsub.f32 0.0, %v467
        %v1063 = vsub.f32 0.0, %v578
        %v1064 = vsub.f32 0.0, %v580
        %v1065 = vsub.f32 0.0, %v691
        %v1066 = vsub.f32 0.0, %v693
        %v1067 = vsub.f32 0.0, %v804
        %v1068 = vsub.f32 0.0, %v806
        %v1069 = vsub.f32 0.0, %v917
        %v1070 = vsub.f32 0.0, %v919
        %v1071 = vsub.f32 0.0, %v471
        %v1072 = vsub.f32 0.0, %v473
        %v1073 = vsub.f32 0.0, %v584
        %v1074 = vsub.f32 0.0, %v586
        %v1075 = vsub.f32 0.0, %v697
        %v1076 = vsub.f32 0.0, %v699
        %v1077 = vsub.f32 0.0, %v810
        %v1078 = vsub.f32 0.0, %v812
        %v1079 = vsub.f32 0.0, %v923
        %v1080 = vsub.f32 0.0, %v925
        %v1081 = vsub.f32 0.0, %v475
        %v1082 = vsub.f32 0.0, %v477
        %v1083 = vsub.f32 0.0, %v588
        %v1084 = vsub.f32 0.0, %v590
        %v1085 = vsub.f32 0.0, %v701
        %v1086 = vsub.f32 0.0, %v703
        %v1087 = vsub.f32 0.0, %v814
        %v1088 = vsub.f32 0.0, %v816
        %v1089 = vsub.f32 0.0, %v927
        %v1090 = vsub.f32 0.0, %v929
        %v1091 = vmin.f32 %v931, 60.0
        %v1092 = vmin.f32 %v932, 60.0
        %v1093 = vmin.f32 %v933, 60.0
        %v1094 = vmin.f32 %v934, 60.0
        %v1095 = vmin.f32 %v935, 60.0
        %v1096 = vmin.f32 %v936, 60.0
        %v1097 = vmin.f32 %v937, 60.0
        %v1098 = vmin.f32 %v938, 60.0
        %v1099 = vmin.f32 %v939, 60.0
        %v1100 = vmin.f32 %v940, 60.0
        %v1101 = vmin.f32 %v941, 60.0
        %v1102 = vmin.f32 %v942, 60.0
        %v1103 = vmin.f32 %v943, 60.0
        %v1104 = vmin.f32 %v944, 60.0
        %v1105 = vmin.f32 %v945, 60.0
        %v1106 = vmin.f32 %v946, 60.0
        %v1107 = vmin.f32 %v947, 60.0
        %v1108 = vmin.f32 %v948, 60.0
        %v1109 = vmin.f32 %v949, 60.0
        %v1110 = vmin.f32 %v950, 60.0
        %v1111 = vmin.f32 %v951, 60.0
        %v1112 = vmin.f32 %v952, 60.0
        %v1113 = vmin.f32 %v953, 60.0
        %v1114 = vmin.f32 %v954, 60.0
        %v1115 = vmin.f32 %v955, 60.0
        %v1116 = vmin.f32 %v956, 60.0
        %v1117 = vmin.f32 %v957, 60.0
        %v1118 = vmin.f32 %v958, 60.0
        %v1119 = vmin.f32 %v959, 60.0
        %v1120 = vmin.f32 %v960, 60.0
        %v1121 = vmin.f32 %v961, 60.0
        %v1122 = vmin.f32 %v962, 60.0
        %v1123 = vmin.f32 %v963, 60.0
        %v1124 = vmin.f32 %v964, 60.0
        %v1125 = vmin.f32 %v965, 60.0
        %v1126 = vmin.f32 %v966, 60.0
        %v1127 = vmin.f32 %v967, 60.0
        %v1128 = vmin.f32 %v968, 60.0
        %v1129 = vmin.f32 %v969, 60.0
        %v1130 = vmin.f32 %v970, 60.0
        %v1131 = vmin.f32 %v971, 60.0
        %v1132 = vmin.f32 %v972, 60.0
        %v1133 = vmin.f32 %v973, 60.0
        %v1134 = vmin.f32 %v974, 60.0
        %v1135 = vmin.f32 %v975, 60.0
        %v1136 = vmin.f32 %v976, 60.0
        %v1137 = vmin.f32 %v977, 60.0
        %v1138 = vmin.f32 %v978, 60.0
        %v1139 = vmin.f32 %v979, 60.0
        %v1140 = vmin.f32 %v980, 60.0
        %v1141 = vmin.f32 %v981, 60.0
        %v1142 = vmin.f32 %v982, 60.0
        %v1143 = vmin.f32 %v983, 60.0
        %v1144 = vmin.f32 %v984, 60.0
        %v1145 = vmin.f32 %v985, 60.0
        %v1146 = vmin.f32 %v986, 60.0
        %v1147 = vmin.f32 %v987, 60.0
        %v1148 = vmin.f32 %v988, 60.0
        %v1149 = vmin.f32 %v989, 60.0
        %v1150 = vmin.f32 %v990, 60.0
        %v1151 = vmin.f32 %v991, 60.0
        %v1152 = vmin.f32 %v992, 60.0
        %v1153 = vmin.f32 %v993, 60.0
        %v1154 = vmin.f32 %v994, 60.0
        %v1155 = vmin.f32 %v995, 60.0
        %v1156 = vmin.f32 %v996, 60.0
        %v1157 = vmin.f32 %v997, 60.0
        %v1158 = vmin.f32 %v998, 60.0
        %v1159 = vmin.f32 %v999, 60.0
        %v1160 = vmin.f32 %v1000, 60.0
        %v1161 = vmin.f32 %v1001, 60.0
        %v1162 = vmin.f32 %v1002, 60.0
        %v1163 = vmin.f32 %v1003, 60.0
        %v1164 = vmin.f32 %v1004, 60.0
        %v1165 = vmin.f32 %v1005, 60.0
        %v1166 = vmin.f32 %v1006, 60.0
        %v1167 = vmin.f32 %v1007, 60.0
        %v1168 = vmin.f32 %v1008, 60.0
        %v1169 = vmin.f32 %v1009, 60.0
        %v1170 = vmin.f32 %v1010, 60.0
        %v1171 = vmin.f32 %v1011, 60.0
        %v1172 = vmin.f32 %v1012, 60.0
        %v1173 = vmin.f32 %v1013, 60.0
        %v1174 = vmin.f32 %v1014, 60.0
        %v1175 = vmin.f32 %v1015, 60.0
        %v1176 = vmin.f32 %v1016, 60.0
        %v1177 = vmin.f32 %v1017, 60.0
        %v1178 = vmin.f32 %v1018, 60.0
        %v1179 = vmin.f32 %v1019, 60.0
        %v1180 = vmin.f32 %v1020, 60.0
        %v1181 = vmin.f32 %v1021, 60.0
        %v1182 = vmin.f32 %v1022, 60.0
        %v1183 = vmin.f32 %v1023, 60.0
        %v1184 = vmin.f32 %v1024, 60.0
        %v1185 = vmin.f32 %v1025, 60.0
        %v1186 = vmin.f32 %v1026, 60.0
        %v1187 = vmin.f32 %v1027, 60.0
        %v1188 = vmin.f32 %v1028, 60.0
        %v1189 = vmin.f32 %v1029, 60.0
        %v1190 = vmin.f32 %v1030, 60.0
        %v1191 = vmin.f32 %v1031, 60.0
        %v1192 = vmin.f32 %v1032, 60.0
        %v1193 = vmin.f32 %v1033, 60.0
        %v1194 = vmin.f32 %v1034, 60.0
        %v1195 = vmin.f32 %v1035, 60.0
        %v1196 = vmin.f32 %v1036, 60.0
        %v1197 = vmin.f32 %v1037, 60.0
        %v1198 = vmin.f32 %v1038, 60.0
        %v1199 = vmin.f32 %v1039, 60.0
        %v1200 = vmin.f32 %v1040, 60.0
        %v1201 = vmin.f32 %v1041, 60.0
        %v1202 = vmin.f32 %v1042, 60.0
        %v1203 = vmin.f32 %v1043, 60.0
        %v1204 = vmin.f32 %v1044, 60.0
        %v1205 = vmin.f32 %v1045, 60.0
        %v1206 = vmin.f32 %v1046, 60.0
        %v1207 = vmin.f32 %v1047, 60.0
        %v1208 = vmin.f32 %v1048, 60.0
        %v1209 = vmin.f32 %v1049, 60.0
        %v1210 = vmin.f32 %v1050, 60.0
        %v1211 = vmin.f32 %v1051, 60.0
        %v1212 = vmin.f32 %v1052, 60.0
        %v1213 = vmin.f32 %v1053, 60.0
        %v1214 = vmin.f32 %v1054, 60.0
        %v1215 = vmin.f32 %v1055, 60.0
        %v1216 = vmin.f32 %v1056, 60.0
        %v1217 = vmin.f32 %v1057, 60.0
        %v1218 = vmin.f32 %v1058, 60.0
        %v1219 = vmin.f32 %v1059, 60.0
        %v1220 = vmin.f32 %v1060, 60.0
        %v1221 = vmin.f32 %v1061, 60.0
        %v1222 = vmin.f32 %v1062, 60.0
        %v1223 = vmin.f32 %v1063, 60.0
        %v1224 = vmin.f32 %v1064, 60.0
        %v1225 = vmin.f32 %v1065, 60.0
        %v1226 = vmin.f32 %v1066, 60.0
        %v1227 = vmin.f32 %v1067, 60.0
        %v1228 = vmin.f32 %v1068, 60.0
        %v1229 = vmin.f32 %v1069, 60.0
        %v1230 = vmin.f32 %v1070, 60.0
        %v1231 = vmin.f32 %v1071, 60.0
        %v1232 = vmin.f32 %v1072, 60.0
        %v1233 = vmin.f32 %v1073, 60.0
        %v1234 = vmin.f32 %v1074, 60.0
        %v1235 = vmin.f32 %v1075, 60.0
        %v1236 = vmin.f32 %v1076, 60.0
        %v1237 = vmin.f32 %v1077, 60.0
        %v1238 = vmin.f32 %v1078, 60.0
        %v1239 = vmin.f32 %v1079, 60.0
        %v1240 = vmin.f32 %v1080, 60.0
        %v1241 = vmin.f32 %v1081, 60.0
        %v1242 = vmin.f32 %v1082, 60.0
        %v1243 = vmin.f32 %v1083, 60.0
        %v1244 = vmin.f32 %v1084, 60.0
        %v1245 = vmin.f32 %v1085, 60.0
        %v1246 = vmin.f32 %v1086, 60.0
        %v1247 = vmin.f32 %v1087, 60.0
        %v1248 = vmin.f32 %v1088, 60.0
        %v1249 = vmin.f32 %v1089, 60.0
        %v1250 = vmin.f32 %v1090, 60.0
        %v1251 = vmul.f32 %v1091, 1.442695
        %v1252 = vpow.pop %v1251
        %v1253 = vmul.f32 %v1092, 1.442695
        %v1254 = vpow.pop %v1253
        %v1255 = vmul.f32 %v1093, 1.442695
        %v1256 = vpow.pop %v1255
        %v1257 = vmul.f32 %v1094, 1.442695
        %v1258 = vpow.pop %v1257
        %v1259 = vmul.f32 %v1095, 1.442695
        %v1260 = vpow.pop %v1259
        %v1261 = vmul.f32 %v1096, 1.442695
        %v1262 = vpow.pop %v1261
        %v1263 = vmul.f32 %v1097, 1.442695
        %v1264 = vpow.pop %v1263
        %v1265 = vmul.f32 %v1098, 1.442695
        %v1266 = vpow.pop %v1265
        %v1267 = vmul.f32 %v1099, 1.442695
        %v1268 = vpow.pop %v1267
        %v1269 = vmul.f32 %v1100, 1.442695
        %v1270 = vpow.pop %v1269
        %v1271 = vmul.f32 %v1101, 1.442695
        %v1272 = vpow.pop %v1271
        %v1273 = vmul.f32 %v1102, 1.442695
        %v1274 = vpow.pop %v1273
        %v1275 = vmul.f32 %v1103, 1.442695
        %v1276 = vpow.pop %v1275
        %v1277 = vmul.f32 %v1104, 1.442695
        %v1278 = vpow.pop %v1277
        %v1279 = vmul.f32 %v1105, 1.442695
        %v1280 = vpow.pop %v1279
        %v1281 = vmul.f32 %v1106, 1.442695
        %v1282 = vpow.pop %v1281
        %v1283 = vmul.f32 %v1107, 1.442695
        %v1284 = vpow.pop %v1283
        %v1285 = vmul.f32 %v1108, 1.442695
        %v1286 = vpow.pop %v1285
        %v1287 = vmul.f32 %v1109, 1.442695
        %v1288 = vpow.pop %v1287
        %v1289 = vmul.f32 %v1110, 1.442695
        %v1290 = vpow.pop %v1289
        %v1291 = vmul.f32 %v1111, 1.442695
        %v1292 = vpow.pop %v1291
        %v1293 = vmul.f32 %v1112, 1.442695
        %v1294 = vpow.pop %v1293
        %v1295 = vmul.f32 %v1113, 1.442695
        %v1296 = vpow.pop %v1295
        %v1297 = vmul.f32 %v1114, 1.442695
        %v1298 = vpow.pop %v1297
        %v1299 = vmul.f32 %v1115, 1.442695
        %v1300 = vpow.pop %v1299
        %v1301 = vmul.f32 %v1116, 1.442695
        %v1302 = vpow.pop %v1301
        %v1303 = vmul.f32 %v1117, 1.442695
        %v1304 = vpow.pop %v1303
        %v1305 = vmul.f32 %v1118, 1.442695
        %v1306 = vpow.pop %v1305
        %v1307 = vmul.f32 %v1119, 1.442695
        %v1308 = vpow.pop %v1307
        %v1309 = vmul.f32 %v1120, 1.442695
        %v1310 = vpow.pop %v1309
        %v1311 = vmul.f32 %v1121, 1.442695
        %v1312 = vpow.pop %v1311
        %v1313 = vmul.f32 %v1122, 1.442695
        %v1314 = vpow.pop %v1313
        %v1315 = vmul.f32 %v1123, 1.442695
        %v1316 = vpow.pop %v1315
        %v1317 = vmul.f32 %v1124, 1.442695
        %v1318 = vpow.pop %v1317
        %v1319 = vmul.f32 %v1125, 1.442695
        %v1320 = vpow.pop %v1319
        %v1321 = vmul.f32 %v1126, 1.442695
        %v1322 = vpow.pop %v1321
        %v1323 = vmul.f32 %v1127, 1.442695
        %v1324 = vpow.pop %v1323
        %v1325 = vmul.f32 %v1128, 1.442695
        %v1326 = vpow.pop %v1325
        %v1327 = vmul.f32 %v1129, 1.442695
        %v1328 = vpow.pop %v1327
        %v1329 = vmul.f32 %v1130, 1.442695
        %v1330 = vpow.pop %v1329
        %v1331 = vmul.f32 %v1131, 1.442695
        %v1332 = vpow.pop %v1331
        %v1333 = vmul.f32 %v1132, 1.442695
        %v1334 = vpow.pop %v1333
        %v1335 = vmul.f32 %v1133, 1.442695
        %v1336 = vpow.pop %v1335
        %v1337 = vmul.f32 %v1134, 1.442695
        %v1338 = vpow.pop %v1337
        %v1339 = vmul.f32 %v1135, 1.442695
        %v1340 = vpow.pop %v1339
        %v1341 = vmul.f32 %v1136, 1.442695
        %v1342 = vpow.pop %v1341
        %v1343 = vmul.f32 %v1137, 1.442695
        %v1344 = vpow.pop %v1343
        %v1345 = vmul.f32 %v1138, 1.442695
        %v1346 = vpow.pop %v1345
        %v1347 = vmul.f32 %v1139, 1.442695
        %v1348 = vpow.pop %v1347
        %v1349 = vmul.f32 %v1140, 1.442695
        %v1350 = vpow.pop %v1349
        %v1351 = vmul.f32 %v1141, 1.442695
        %v1352 = vpow.pop %v1351
        %v1353 = vmul.f32 %v1142, 1.442695
        %v1354 = vpow.pop %v1353
        %v1355 = vmul.f32 %v1143, 1.442695
        %v1356 = vpow.pop %v1355
        %v1357 = vmul.f32 %v1144, 1.442695
        %v1358 = vpow.pop %v1357
        %v1359 = vmul.f32 %v1145, 1.442695
        %v1360 = vpow.pop %v1359
        %v1361 = vmul.f32 %v1146, 1.442695
        %v1362 = vpow.pop %v1361
        %v1363 = vmul.f32 %v1147, 1.442695
        %v1364 = vpow.pop %v1363
        %v1365 = vmul.f32 %v1148, 1.442695
        %v1366 = vpow.pop %v1365
        %v1367 = vmul.f32 %v1149, 1.442695
        %v1368 = vpow.pop %v1367
        %v1369 = vmul.f32 %v1150, 1.442695
        %v1370 = vpow.pop %v1369
        %v1371 = vmul.f32 %v1151, 1.442695
        %v1372 = vpow.pop %v1371
        %v1373 = vmul.f32 %v1152, 1.442695
        %v1374 = vpow.pop %v1373
        %v1375 = vmul.f32 %v1153, 1.442695
        %v1376 = vpow.pop %v1375
        %v1377 = vmul.f32 %v1154, 1.442695
        %v1378 = vpow.pop %v1377
        %v1379 = vmul.f32 %v1155, 1.442695
        %v1380 = vpow.pop %v1379
        %v1381 = vmul.f32 %v1156, 1.442695
        %v1382 = vpow.pop %v1381
        %v1383 = vmul.f32 %v1157, 1.442695
        %v1384 = vpow.pop %v1383
        %v1385 = vmul.f32 %v1158, 1.442695
        %v1386 = vpow.pop %v1385
        %v1387 = vmul.f32 %v1159, 1.442695
        %v1388 = vpow.pop %v1387
        %v1389 = vmul.f32 %v1160, 1.442695
        %v1390 = vpow.pop %v1389
        %v1391 = vmul.f32 %v1161, 1.442695
        %v1392 = vpow.pop %v1391
        %v1393 = vmul.f32 %v1162, 1.442695
        %v1394 = vpow.pop %v1393
        %v1395 = vmul.f32 %v1163, 1.442695
        %v1396 = vpow.pop %v1395
        %v1397 = vmul.f32 %v1164, 1.442695
        %v1398 = vpow.pop %v1397
        %v1399 = vmul.f32 %v1165, 1.442695
        %v1400 = vpow.pop %v1399
        %v1401 = vmul.f32 %v1166, 1.442695
        %v1402 = vpow.pop %v1401
        %v1403 = vmul.f32 %v1167, 1.442695
        %v1404 = vpow.pop %v1403
        %v1405 = vmul.f32 %v1168, 1.442695
        %v1406 = vpow.pop %v1405
        %v1407 = vmul.f32 %v1169, 1.442695
        %v1408 = vpow.pop %v1407
        %v1409 = vmul.f32 %v1170, 1.442695
        %v1410 = vpow.pop %v1409
        %v1411 = vmul.f32 %v1171, 1.442695
        %v1412 = vpow.pop %v1411
        %v1413 = vmul.f32 %v1172, 1.442695
        %v1414 = vpow.pop %v1413
        %v1415 = vmul.f32 %v1173, 1.442695
        %v1416 = vpow.pop %v1415
        %v1417 = vmul.f32 %v1174, 1.442695
        %v1418 = vpow.pop %v1417
        %v1419 = vmul.f32 %v1175, 1.442695
        %v1420 = vpow.pop %v1419
        %v1421 = vmul.f32 %v1176, 1.442695
        %v1422 = vpow.pop %v1421
        %v1423 = vmul.f32 %v1177, 1.442695
        %v1424 = vpow.pop %v1423
        %v1425 = vmul.f32 %v1178, 1.442695
        %v1426 = vpow.pop %v1425
        %v1427 = vmul.f32 %v1179, 1.442695
        %v1428 = vpow.pop %v1427
        %v1429 = vmul.f32 %v1180, 1.442695
        %v1430 = vpow.pop %v1429
        %v1431 = vmul.f32 %v1181, 1.442695
        %v1432 = vpow.pop %v1431
        %v1433 = vmul.f32 %v1182, 1.442695
        %v1434 = vpow.pop %v1433
        %v1435 = vmul.f32 %v1183, 1.442695
        %v1436 = vpow.pop %v1435
        %v1437 = vmul.f32 %v1184, 1.442695
        %v1438 = vpow.pop %v1437
        %v1439 = vmul.f32 %v1185, 1.442695
        %v1440 = vpow.pop %v1439
        %v1441 = vmul.f32 %v1186, 1.442695
        %v1442 = vpow.pop %v1441
        %v1443 = vmul.f32 %v1187, 1.442695
        %v1444 = vpow.pop %v1443
        %v1445 = vmul.f32 %v1188, 1.442695
        %v1446 = vpow.pop %v1445
        %v1447 = vmul.f32 %v1189, 1.442695
        %v1448 = vpow.pop %v1447
        %v1449 = vmul.f32 %v1190, 1.442695
        %v1450 = vpow.pop %v1449
        %v1451 = vmul.f32 %v1191, 1.442695
        %v1452 = vpow.pop %v1451
        %v1453 = vmul.f32 %v1192, 1.442695
        %v1454 = vpow.pop %v1453
        %v1455 = vmul.f32 %v1193, 1.442695
        %v1456 = vpow.pop %v1455
        %v1457 = vmul.f32 %v1194, 1.442695
        %v1458 = vpow.pop %v1457
        %v1459 = vmul.f32 %v1195, 1.442695
        %v1460 = vpow.pop %v1459
        %v1461 = vmul.f32 %v1196, 1.442695
        %v1462 = vpow.pop %v1461
        %v1463 = vmul.f32 %v1197, 1.442695
        %v1464 = vpow.pop %v1463
        %v1465 = vmul.f32 %v1198, 1.442695
        %v1466 = vpow.pop %v1465
        %v1467 = vmul.f32 %v1199, 1.442695
        %v1468 = vpow.pop %v1467
        %v1469 = vmul.f32 %v1200, 1.442695
        %v1470 = vpow.pop %v1469
        %v1471 = vmul.f32 %v1201, 1.442695
        %v1472 = vpow.pop %v1471
        %v1473 = vmul.f32 %v1202, 1.442695
        %v1474 = vpow.pop %v1473
        %v1475 = vmul.f32 %v1203, 1.442695
        %v1476 = vpow.pop %v1475
        %v1477 = vmul.f32 %v1204, 1.442695
        %v1478 = vpow.pop %v1477
        %v1479 = vmul.f32 %v1205, 1.442695
        %v1480 = vpow.pop %v1479
        %v1481 = vmul.f32 %v1206, 1.442695
        %v1482 = vpow.pop %v1481
        %v1483 = vmul.f32 %v1207, 1.442695
        %v1484 = vpow.pop %v1483
        %v1485 = vmul.f32 %v1208, 1.442695
        %v1486 = vpow.pop %v1485
        %v1487 = vmul.f32 %v1209, 1.442695
        %v1488 = vpow.pop %v1487
        %v1489 = vmul.f32 %v1210, 1.442695
        %v1490 = vpow.pop %v1489
        %v1491 = vmul.f32 %v1211, 1.442695
        %v1492 = vpow.pop %v1491
        %v1493 = vmul.f32 %v1212, 1.442695
        %v1494 = vpow.pop %v1493
        %v1495 = vmul.f32 %v1213, 1.442695
        %v1496 = vpow.pop %v1495
        %v1497 = vmul.f32 %v1214, 1.442695
        %v1498 = vpow.pop %v1497
        %v1499 = vmul.f32 %v1215, 1.442695
        %v1500 = vpow.pop %v1499
        %v1501 = vmul.f32 %v1216, 1.442695
        %v1502 = vpow.pop %v1501
        %v1503 = vmul.f32 %v1217, 1.442695
        %v1504 = vpow.pop %v1503
        %v1505 = vmul.f32 %v1218, 1.442695
        %v1506 = vpow.pop %v1505
        %v1507 = vmul.f32 %v1219, 1.442695
        %v1508 = vpow.pop %v1507
        %v1509 = vmul.f32 %v1220, 1.442695
        %v1510 = vpow.pop %v1509
        %v1511 = vmul.f32 %v1221, 1.442695
        %v1512 = vpow.pop %v1511
        %v1513 = vmul.f32 %v1222, 1.442695
        %v1514 = vpow.pop %v1513
        %v1515 = vmul.f32 %v1223, 1.442695
        %v1516 = vpow.pop %v1515
        %v1517 = vmul.f32 %v1224, 1.442695
        %v1518 = vpow.pop %v1517
        %v1519 = vmul.f32 %v1225, 1.442695
        %v1520 = vpow.pop %v1519
        %v1521 = vmul.f32 %v1226, 1.442695
        %v1522 = vpow.pop %v1521
        %v1523 = vmul.f32 %v1227, 1.442695
        %v1524 = vpow.pop %v1523
        %v1525 = vmul.f32 %v1228, 1.442695
        %v1526 = vpow.pop %v1525
        %v1527 = vmul.f32 %v1229, 1.442695
        %v1528 = vpow.pop %v1527
        %v1529 = vmul.f32 %v1230, 1.442695
        %v1530 = vpow.pop %v1529
        %v1531 = vmul.f32 %v1231, 1.442695
        %v1532 = vpow.pop %v1531
        %v1533 = vmul.f32 %v1232, 1.442695
        %v1534 = vpow.pop %v1533
        %v1535 = vmul.f32 %v1233, 1.442695
        %v1536 = vpow.pop %v1535
        %v1537 = vmul.f32 %v1234, 1.442695
        %v1538 = vpow.pop %v1537
        %v1539 = vmul.f32 %v1235, 1.442695
        %v1540 = vpow.pop %v1539
        %v1541 = vmul.f32 %v1236, 1.442695
        %v1542 = vpow.pop %v1541
        %v1543 = vmul.f32 %v1237, 1.442695
        %v1544 = vpow.pop %v1543
        %v1545 = vmul.f32 %v1238, 1.442695
        %v1546 = vpow.pop %v1545
        %v1547 = vmul.f32 %v1239, 1.442695
        %v1548 = vpow.pop %v1547
        %v1549 = vmul.f32 %v1240, 1.442695
        %v1550 = vpow.pop %v1549
        %v1551 = vmul.f32 %v1241, 1.442695
        %v1552 = vpow.pop %v1551
        %v1553 = vmul.f32 %v1242, 1.442695
        %v1554 = vpow.pop %v1553
        %v1555 = vmul.f32 %v1243, 1.442695
        %v1556 = vpow.pop %v1555
        %v1557 = vmul.f32 %v1244, 1.442695
        %v1558 = vpow.pop %v1557
        %v1559 = vmul.f32 %v1245, 1.442695
        %v1560 = vpow.pop %v1559
        %v1561 = vmul.f32 %v1246, 1.442695
        %v1562 = vpow.pop %v1561
        %v1563 = vmul.f32 %v1247, 1.442695
        %v1564 = vpow.pop %v1563
        %v1565 = vmul.f32 %v1248, 1.442695
        %v1566 = vpow.pop %v1565
        %v1567 = vmul.f32 %v1249, 1.442695
        %v1568 = vpow.pop %v1567
        %v1569 = vmul.f32 %v1250, 1.442695
        %v1570 = vpow.pop %v1569
        %v1571 = vadd.f32 %v1252, 1.0
        %v1572 = vadd.f32 %v1254, 1.0
        %v1573 = vadd.f32 %v1256, 1.0
        %v1574 = vadd.f32 %v1258, 1.0
        %v1575 = vadd.f32 %v1260, 1.0
        %v1576 = vadd.f32 %v1262, 1.0
        %v1577 = vadd.f32 %v1264, 1.0
        %v1578 = vadd.f32 %v1266, 1.0
        %v1579 = vadd.f32 %v1268, 1.0
        %v1580 = vadd.f32 %v1270, 1.0
        %v1581 = vadd.f32 %v1272, 1.0
        %v1582 = vadd.f32 %v1274, 1.0
        %v1583 = vadd.f32 %v1276, 1.0
        %v1584 = vadd.f32 %v1278, 1.0
        %v1585 = vadd.f32 %v1280, 1.0
        %v1586 = vadd.f32 %v1282, 1.0
        %v1587 = vadd.f32 %v1284, 1.0
        %v1588 = vadd.f32 %v1286, 1.0
        %v1589 = vadd.f32 %v1288, 1.0
        %v1590 = vadd.f32 %v1290, 1.0
        %v1591 = vadd.f32 %v1292, 1.0
        %v1592 = vadd.f32 %v1294, 1.0
        %v1593 = vadd.f32 %v1296, 1.0
        %v1594 = vadd.f32 %v1298, 1.0
        %v1595 = vadd.f32 %v1300, 1.0
        %v1596 = vadd.f32 %v1302, 1.0
        %v1597 = vadd.f32 %v1304, 1.0
        %v1598 = vadd.f32 %v1306, 1.0
        %v1599 = vadd.f32 %v1308, 1.0
        %v1600 = vadd.f32 %v1310, 1.0
        %v1601 = vadd.f32 %v1312, 1.0
        %v1602 = vadd.f32 %v1314, 1.0
        %v1603 = vadd.f32 %v1316, 1.0
        %v1604 = vadd.f32 %v1318, 1.0
        %v1605 = vadd.f32 %v1320, 1.0
        %v1606 = vadd.f32 %v1322, 1.0
        %v1607 = vadd.f32 %v1324, 1.0
        %v1608 = vadd.f32 %v1326, 1.0
        %v1609 = vadd.f32 %v1328, 1.0
        %v1610 = vadd.f32 %v1330, 1.0
        %v1611 = vadd.f32 %v1332, 1.0
        %v1612 = vadd.f32 %v1334, 1.0
        %v1613 = vadd.f32 %v1336, 1.0
        %v1614 = vadd.f32 %v1338, 1.0
        %v1615 = vadd.f32 %v1340, 1.0
        %v1616 = vadd.f32 %v1342, 1.0
        %v1617 = vadd.f32 %v1344, 1.0
        %v1618 = vadd.f32 %v1346, 1.0
        %v1619 = vadd.f32 %v1348, 1.0
        %v1620 = vadd.f32 %v1350, 1.0
        %v1621 = vadd.f32 %v1352, 1.0
        %v1622 = vadd.f32 %v1354, 1.0
        %v1623 = vadd.f32 %v1356, 1.0
        %v1624 = vadd.f32 %v1358, 1.0
        %v1625 = vadd.f32 %v1360, 1.0
        %v1626 = vadd.f32 %v1362, 1.0
        %v1627 = vadd.f32 %v1364, 1.0
        %v1628 = vadd.f32 %v1366, 1.0
        %v1629 = vadd.f32 %v1368, 1.0
        %v1630 = vadd.f32 %v1370, 1.0
        %v1631 = vadd.f32 %v1372, 1.0
        %v1632 = vadd.f32 %v1374, 1.0
        %v1633 = vadd.f32 %v1376, 1.0
        %v1634 = vadd.f32 %v1378, 1.0
        %v1635 = vadd.f32 %v1380, 1.0
        %v1636 = vadd.f32 %v1382, 1.0
        %v1637 = vadd.f32 %v1384, 1.0
        %v1638 = vadd.f32 %v1386, 1.0
        %v1639 = vadd.f32 %v1388, 1.0
        %v1640 = vadd.f32 %v1390, 1.0
        %v1641 = vadd.f32 %v1392, 1.0
        %v1642 = vadd.f32 %v1394, 1.0
        %v1643 = vadd.f32 %v1396, 1.0
        %v1644 = vadd.f32 %v1398, 1.0
        %v1645 = vadd.f32 %v1400, 1.0
        %v1646 = vadd.f32 %v1402, 1.0
        %v1647 = vadd.f32 %v1404, 1.0
        %v1648 = vadd.f32 %v1406, 1.0
        %v1649 = vadd.f32 %v1408, 1.0
        %v1650 = vadd.f32 %v1410, 1.0
        %v1651 = vadd.f32 %v1412, 1.0
        %v1652 = vadd.f32 %v1414, 1.0
        %v1653 = vadd.f32 %v1416, 1.0
        %v1654 = vadd.f32 %v1418, 1.0
        %v1655 = vadd.f32 %v1420, 1.0
        %v1656 = vadd.f32 %v1422, 1.0
        %v1657 = vadd.f32 %v1424, 1.0
        %v1658 = vadd.f32 %v1426, 1.0
        %v1659 = vadd.f32 %v1428, 1.0
        %v1660 = vadd.f32 %v1430, 1.0
        %v1661 = vadd.f32 %v1432, 1.0
        %v1662 = vadd.f32 %v1434, 1.0
        %v1663 = vadd.f32 %v1436, 1.0
        %v1664 = vadd.f32 %v1438, 1.0
        %v1665 = vadd.f32 %v1440, 1.0
        %v1666 = vadd.f32 %v1442, 1.0
        %v1667 = vadd.f32 %v1444, 1.0
        %v1668 = vadd.f32 %v1446, 1.0
        %v1669 = vadd.f32 %v1448, 1.0
        %v1670 = vadd.f32 %v1450, 1.0
        %v1671 = vadd.f32 %v1452, 1.0
        %v1672 = vadd.f32 %v1454, 1.0
        %v1673 = vadd.f32 %v1456, 1.0
        %v1674 = vadd.f32 %v1458, 1.0
        %v1675 = vadd.f32 %v1460, 1.0
        %v1676 = vadd.f32 %v1462, 1.0
        %v1677 = vadd.f32 %v1464, 1.0
        %v1678 = vadd.f32 %v1466, 1.0
        %v1679 = vadd.f32 %v1468, 1.0
        %v1680 = vadd.f32 %v1470, 1.0
        %v1681 = vadd.f32 %v1472, 1.0
        %v1682 = vadd.f32 %v1474, 1.0
        %v1683 = vadd.f32 %v1476, 1.0
        %v1684 = vadd.f32 %v1478, 1.0
        %v1685 = vadd.f32 %v1480, 1.0
        %v1686 = vadd.f32 %v1482, 1.0
        %v1687 = vadd.f32 %v1484, 1.0
        %v1688 = vadd.f32 %v1486, 1.0
        %v1689 = vadd.f32 %v1488, 1.0
        %v1690 = vadd.f32 %v1490, 1.0
        %v1691 = vadd.f32 %v1492, 1.0
        %v1692 = vadd.f32 %v1494, 1.0
        %v1693 = vadd.f32 %v1496, 1.0
        %v1694 = vadd.f32 %v1498, 1.0
        %v1695 = vadd.f32 %v1500, 1.0
        %v1696 = vadd.f32 %v1502, 1.0
        %v1697 = vadd.f32 %v1504, 1.0
        %v1698 = vadd.f32 %v1506, 1.0
        %v1699 = vadd.f32 %v1508, 1.0
        %v1700 = vadd.f32 %v1510, 1.0
        %v1701 = vadd.f32 %v1512, 1.0
        %v1702 = vadd.f32 %v1514, 1.0
        %v1703 = vadd.f32 %v1516, 1.0
        %v1704 = vadd.f32 %v1518, 1.0
        %v1705 = vadd.f32 %v1520, 1.0
        %v1706 = vadd.f32 %v1522, 1.0
        %v1707 = vadd.f32 %v1524, 1.0
        %v1708 = vadd.f32 %v1526, 1.0
        %v1709 = vadd.f32 %v1528, 1.0
        %v1710 = vadd.f32 %v1530, 1.0
        %v1711 = vadd.f32 %v1532, 1.0
        %v1712 = vadd.f32 %v1534, 1.0
        %v1713 = vadd.f32 %v1536, 1.0
        %v1714 = vadd.f32 %v1538, 1.0
        %v1715 = vadd.f32 %v1540, 1.0
        %v1716 = vadd.f32 %v1542, 1.0
        %v1717 = vadd.f32 %v1544, 1.0
        %v1718 = vadd.f32 %v1546, 1.0
        %v1719 = vadd.f32 %v1548, 1.0
        %v1720 = vadd.f32 %v1550, 1.0
        %v1721 = vadd.f32 %v1552, 1.0
        %v1722 = vadd.f32 %v1554, 1.0
        %v1723 = vadd.f32 %v1556, 1.0
        %v1724 = vadd.f32 %v1558, 1.0
        %v1725 = vadd.f32 %v1560, 1.0
        %v1726 = vadd.f32 %v1562, 1.0
        %v1727 = vadd.f32 %v1564, 1.0
        %v1728 = vadd.f32 %v1566, 1.0
        %v1729 = vadd.f32 %v1568, 1.0
        %v1730 = vadd.f32 %v1570, 1.0
        %v1731 = vrcp.pop %v1571
        %v1732 = vrcp.pop %v1572
        %v1733 = vrcp.pop %v1573
        %v1734 = vrcp.pop %v1574
        %v1735 = vrcp.pop %v1575
        %v1736 = vrcp.pop %v1576
        %v1737 = vrcp.pop %v1577
        %v1738 = vrcp.pop %v1578
        %v1739 = vrcp.pop %v1579
        %v1740 = vrcp.pop %v1580
        %v1741 = vrcp.pop %v1581
        %v1742 = vrcp.pop %v1582
        %v1743 = vrcp.pop %v1583
        %v1744 = vrcp.pop %v1584
        %v1745 = vrcp.pop %v1585
        %v1746 = vrcp.pop %v1586
        %v1747 = vrcp.pop %v1587
        %v1748 = vrcp.pop %v1588
        %v1749 = vrcp.pop %v1589
        %v1750 = vrcp.pop %v1590
        %v1751 = vrcp.pop %v1591
        %v1752 = vrcp.pop %v1592
        %v1753 = vrcp.pop %v1593
        %v1754 = vrcp.pop %v1594
        %v1755 = vrcp.pop %v1595
        %v1756 = vrcp.pop %v1596
        %v1757 = vrcp.pop %v1597
        %v1758 = vrcp.pop %v1598
        %v1759 = vrcp.pop %v1599
        %v1760 = vrcp.pop %v1600
        %v1761 = vrcp.pop %v1601
        %v1762 = vrcp.pop %v1602
        %v1763 = vrcp.pop %v1603
        %v1764 = vrcp.pop %v1604
        %v1765 = vrcp.pop %v1605
        %v1766 = vrcp.pop %v1606
        %v1767 = vrcp.pop %v1607
        %v1768 = vrcp.pop %v1608
        %v1769 = vrcp.pop %v1609
        %v1770 = vrcp.pop %v1610
        %v1771 = vrcp.pop %v1611
        %v1772 = vrcp.pop %v1612
        %v1773 = vrcp.pop %v1613
        %v1774 = vrcp.pop %v1614
        %v1775 = vrcp.pop %v1615
        %v1776 = vrcp.pop %v1616
        %v1777 = vrcp.pop %v1617
        %v1778 = vrcp.pop %v1618
        %v1779 = vrcp.pop %v1619
        %v1780 = vrcp.pop %v1620
        %v1781 = vrcp.pop %v1621
        %v1782 = vrcp.pop %v1622
        %v1783 = vrcp.pop %v1623
        %v1784 = vrcp.pop %v1624
        %v1785 = vrcp.pop %v1625
        %v1786 = vrcp.pop %v1626
        %v1787 = vrcp.pop %v1627
        %v1788 = vrcp.pop %v1628
        %v1789 = vrcp.pop %v1629
        %v1790 = vrcp.pop %v1630
        %v1791 = vrcp.pop %v1631
        %v1792 = vrcp.pop %v1632
        %v1793 = vrcp.pop %v1633
        %v1794 = vrcp.pop %v1634
        %v1795 = vrcp.pop %v1635
        %v1796 = vrcp.pop %v1636
        %v1797 = vrcp.pop %v1637
        %v1798 = vrcp.pop %v1638
        %v1799 = vrcp.pop %v1639
        %v1800 = vrcp.pop %v1640
        %v1801 = vrcp.pop %v1641
        %v1802 = vrcp.pop %v1642
        %v1803 = vrcp.pop %v1643
        %v1804 = vrcp.pop %v1644
        %v1805 = vrcp.pop %v1645
        %v1806 = vrcp.pop %v1646
        %v1807 = vrcp.pop %v1647
        %v1808 = vrcp.pop %v1648
        %v1809 = vrcp.pop %v1649
        %v1810 = vrcp.pop %v1650
        %v1811 = vrcp.pop %v1651
        %v1812 = vrcp.pop %v1652
        %v1813 = vrcp.pop %v1653
        %v1814 = vrcp.pop %v1654
        %v1815 = vrcp.pop %v1655
        %v1816 = vrcp.pop %v1656
        %v1817 = vrcp.pop %v1657
        %v1818 = vrcp.pop %v1658
        %v1819 = vrcp.pop %v1659
        %v1820 = vrcp.pop %v1660
        %v1821 = vrcp.pop %v1661
        %v1822 = vrcp.pop %v1662
        %v1823 = vrcp.pop %v1663
        %v1824 = vrcp.pop %v1664
        %v1825 = vrcp.pop %v1665
        %v1826 = vrcp.pop %v1666
        %v1827 = vrcp.pop %v1667
        %v1828 = vrcp.pop %v1668
        %v1829 = vrcp.pop %v1669
        %v1830 = vrcp.pop %v1670
        %v1831 = vrcp.pop %v1671
        %v1832 = vrcp.pop %v1672
        %v1833 = vrcp.pop %v1673
        %v1834 = vrcp.pop %v1674
        %v1835 = vrcp.pop %v1675
        %v1836 = vrcp.pop %v1676
        %v1837 = vrcp.pop %v1677
        %v1838 = vrcp.pop %v1678
        %v1839 = vrcp.pop %v1679
        %v1840 = vrcp.pop %v1680
        %v1841 = vrcp.pop %v1681
        %v1842 = vrcp.pop %v1682
        %v1843 = vrcp.pop %v1683
        %v1844 = vrcp.pop %v1684
        %v1845 = vrcp.pop %v1685
        %v1846 = vrcp.pop %v1686
        %v1847 = vrcp.pop %v1687
        %v1848 = vrcp.pop %v1688
        %v1849 = vrcp.pop %v1689
        %v1850 = vrcp.pop %v1690
        %v1851 = vrcp.pop %v1691
        %v1852 = vrcp.pop %v1692
        %v1853 = vrcp.pop %v1693
        %v1854 = vrcp.pop %v1694
        %v1855 = vrcp.pop %v1695
        %v1856 = vrcp.pop %v1696
        %v1857 = vrcp.pop %v1697
        %v1858 = vrcp.pop %v1698
        %v1859 = vrcp.pop %v1699
        %v1860 = vrcp.pop %v1700
        %v1861 = vrcp.pop %v1701
        %v1862 = vrcp.pop %v1702
        %v1863 = vrcp.pop %v1703
        %v1864 = vrcp.pop %v1704
        %v1865 = vrcp.pop %v1705
        %v1866 = vrcp.pop %v1706
        %v1867 = vrcp.pop %v1707
        %v1868 = vrcp.pop %v1708
        %v1869 = vrcp.pop %v1709
        %v1870 = vrcp.pop %v1710
        %v1871 = vrcp.pop %v1711
        %v1872 = vrcp.pop %v1712
        %v1873 = vrcp.pop %v1713
        %v1874 = vrcp.pop %v1714
        %v1875 = vrcp.pop %v1715
        %v1876 = vrcp.pop %v1716
        %v1877 = vrcp.pop %v1717
        %v1878 = vrcp.pop %v1718
        %v1879 = vrcp.pop %v1719
        %v1880 = vrcp.pop %v1720
        %v1881 = vrcp.pop %v1721
        %v1882 = vrcp.pop %v1722
        %v1883 = vrcp.pop %v1723
        %v1884 = vrcp.pop %v1724
        %v1885 = vrcp.pop %v1725
        %v1886 = vrcp.pop %v1726
        %v1887 = vrcp.pop %v1727
        %v1888 = vrcp.pop %v1728
        %v1889 = vrcp.pop %v1729
        %v1890 = vrcp.pop %v1730
        %v1891 = vmul.f32 %v401, %v1731
        %v1892 = vmul.f32 %v403, %v1732
        %v1893 = vmul.f32 %v514, %v1733
        %v1894 = vmul.f32 %v516, %v1734
        %v1895 = vmul.f32 %v627, %v1735
        %v1896 = vmul.f32 %v629, %v1736
        %v1897 = vmul.f32 %v740, %v1737
        %v1898 = vmul.f32 %v742, %v1738
        %v1899 = vmul.f32 %v853, %v1739
        %v1900 = vmul.f32 %v855, %v1740
        %v1901 = vmul.f32 %v405, %v1741
        %v1902 = vmul.f32 %v407, %v1742
        %v1903 = vmul.f32 %v518, %v1743
        %v1904 = vmul.f32 %v520, %v1744
        %v1905 = vmul.f32 %v631, %v1745
        %v1906 = vmul.f32 %v633, %v1746
        %v1907 = vmul.f32 %v744, %v1747
        %v1908 = vmul.f32 %v746, %v1748
        %v1909 = vmul.f32 %v857, %v1749
        %v1910 = vmul.f32 %v859, %v1750
        %v1911 = vmul.f32 %v411, %v1751
        %v1912 = vmul.f32 %v413, %v1752
        %v1913 = vmul.f32 %v524, %v1753
        %v1914 = vmul.f32 %v526, %v1754
        %v1915 = vmul.f32 %v637, %v1755
        %v1916 = vmul.f32 %v639, %v1756
        %v1917 = vmul.f32 %v750, %v1757
        %v1918 = vmul.f32 %v752, %v1758
        %v1919 = vmul.f32 %v863, %v1759
        %v1920 = vmul.f32 %v865, %v1760
        %v1921 = vmul.f32 %v415, %v1761
        %v1922 = vmul.f32 %v417, %v1762
        %v1923 = vmul.f32 %v528, %v1763
        %v1924 = vmul.f32 %v530, %v1764
        %v1925 = vmul.f32 %v641, %v1765
        %v1926 = vmul.f32 %v643, %v1766
        %v1927 = vmul.f32 %v754, %v1767
        %v1928 = vmul.f32 %v756, %v1768
        %v1929 = vmul.f32 %v867, %v1769
        %v1930 = vmul.f32 %v869, %v1770
        %v1931 = vmul.f32 %v421, %v1771
        %v1932 = vmul.f32 %v423, %v1772
        %v1933 = vmul.f32 %v534, %v1773
        %v1934 = vmul.f32 %v536, %v1774
        %v1935 = vmul.f32 %v647, %v1775
        %v1936 = vmul.f32 %v649, %v1776
        %v1937 = vmul.f32 %v760, %v1777
        %v1938 = vmul.f32 %v762, %v1778
        %v1939 = vmul.f32 %v873, %v1779
        %v1940 = vmul.f32 %v875, %v1780
        %v1941 = vmul.f32 %v425, %v1781
        %v1942 = vmul.f32 %v427, %v1782
        %v1943 = vmul.f32 %v538, %v1783
        %v1944 = vmul.f32 %v540, %v1784
        %v1945 = vmul.f32 %v651, %v1785
        %v1946 = vmul.f32 %v653, %v1786
        %v1947 = vmul.f32 %v764, %v1787
        %v1948 = vmul.f32 %v766, %v1788
        %v1949 = vmul.f32 %v877, %v1789
        %v1950 = vmul.f32 %v879, %v1790
        %v1951 = vmul.f32 %v431, %v1791
        %v1952 = vmul.f32 %v433, %v1792
        %v1953 = vmul.f32 %v544, %v1793
        %v1954 = vmul.f32 %v546, %v1794
        %v1955 = vmul.f32 %v657, %v1795
        %v1956 = vmul.f32 %v659, %v1796
        %v1957 = vmul.f32 %v770, %v1797
        %v1958 = vmul.f32 %v772, %v1798
        %v1959 = vmul.f32 %v883, %v1799
        %v1960 = vmul.f32 %v885, %v1800
        %v1961 = vmul.f32 %v435, %v1801
        %v1962 = vmul.f32 %v437, %v1802
        %v1963 = vmul.f32 %v548, %v1803
        %v1964 = vmul.f32 %v550, %v1804
        %v1965 = vmul.f32 %v661, %v1805
        %v1966 = vmul.f32 %v663, %v1806
        %v1967 = vmul.f32 %v774, %v1807
        %v1968 = vmul.f32 %v776, %v1808
        %v1969 = vmul.f32 %v887, %v1809
        %v1970 = vmul.f32 %v889, %v1810
        %v1971 = vmul.f32 %v441, %v1811
        %v1972 = vmul.f32 %v443, %v1812
        %v1973 = vmul.f32 %v554, %v1813
        %v1974 = vmul.f32 %v556, %v1814
        %v1975 = vmul.f32 %v667, %v1815
        %v1976 = vmul.f32 %v669, %v1816
        %v1977 = vmul.f32 %v780, %v1817
        %v1978 = vmul.f32 %v782, %v1818
        %v1979 = vmul.f32 %v893, %v1819
        %v1980 = vmul.f32 %v895, %v1820
        %v1981 = vmul.f32 %v445, %v1821
        %v1982 = vmul.f32 %v447, %v1822
        %v1983 = vmul.f32 %v558, %v1823
        %v1984 = vmul.f32 %v560, %v1824
        %v1985 = vmul.f32 %v671, %v1825
        %v1986 = vmul.f32 %v673, %v1826
        %v1987 = vmul.f32 %v784, %v1827
        %v1988 = vmul.f32 %v786, %v1828
        %v1989 = vmul.f32 %v897, %v1829
        %v1990 = vmul.f32 %v899, %v1830
        %v1991 = vmul.f32 %v451, %v1831
        %v1992 = vmul.f32 %v453, %v1832
        %v1993 = vmul.f32 %v564, %v1833
        %v1994 = vmul.f32 %v566, %v1834
        %v1995 = vmul.f32 %v677, %v1835
        %v1996 = vmul.f32 %v679, %v1836
        %v1997 = vmul.f32 %v790, %v1837
        %v1998 = vmul.f32 %v792, %v1838
        %v1999 = vmul.f32 %v903, %v1839
        %v2000 = vmul.f32 %v905, %v1840
        %v2001 = vmul.f32 %v455, %v1841
        %v2002 = vmul.f32 %v457, %v1842
        %v2003 = vmul.f32 %v568, %v1843
        %v2004 = vmul.f32 %v570, %v1844
        %v2005 = vmul.f32 %v681, %v1845
        %v2006 = vmul.f32 %v683, %v1846
        %v2007 = vmul.f32 %v794, %v1847
        %v2008 = vmul.f32 %v796, %v1848
        %v2009 = vmul.f32 %v907, %v1849
        %v2010 = vmul.f32 %v909, %v1850
        %v2011 = vmul.f32 %v461, %v1851
        %v2012 = vmul.f32 %v463, %v1852
        %v2013 = vmul.f32 %v574, %v1853
        %v2014 = vmul.f32 %v576, %v1854
        %v2015 = vmul.f32 %v687, %v1855
        %v2016 = vmul.f32 %v689, %v1856
        %v2017 = vmul.f32 %v800, %v1857
        %v2018 = vmul.f32 %v802, %v1858
        %v2019 = vmul.f32 %v913, %v1859
        %v2020 = vmul.f32 %v915, %v1860
        %v2021 = vmul.f32 %v465, %v1861
        %v2022 = vmul.f32 %v467, %v1862
        %v2023 = vmul.f32 %v578, %v1863
        %v2024 = vmul.f32 %v580, %v1864
        %v2025 = vmul.f32 %v691, %v1865
        %v2026 = vmul.f32 %v693, %v1866
        %v2027 = vmul.f32 %v804, %v1867
        %v2028 = vmul.f32 %v806, %v1868
        %v2029 = vmul.f32 %v917, %v1869
        %v2030 = vmul.f32 %v919, %v1870
        %v2031 = vmul.f32 %v471, %v1871
        %v2032 = vmul.f32 %v473, %v1872
        %v2033 = vmul.f32 %v584, %v1873
        %v2034 = vmul.f32 %v586, %v1874
        %v2035 = vmul.f32 %v697, %v1875
        %v2036 = vmul.f32 %v699, %v1876
        %v2037 = vmul.f32 %v810, %v1877
        %v2038 = vmul.f32 %v812, %v1878
        %v2039 = vmul.f32 %v923, %v1879
        %v2040 = vmul.f32 %v925, %v1880
        %v2041 = vmul.f32 %v475, %v1881
        %v2042 = vmul.f32 %v477, %v1882
        %v2043 = vmul.f32 %v588, %v1883
        %v2044 = vmul.f32 %v590, %v1884
        %v2045 = vmul.f32 %v701, %v1885
        %v2046 = vmul.f32 %v703, %v1886
        %v2047 = vmul.f32 %v814, %v1887
        %v2048 = vmul.f32 %v816, %v1888
        %v2049 = vmul.f32 %v927, %v1889
        %v2050 = vmul.f32 %v929, %v1890
        %v2051 = vld [vmem:[#allocation2] sm:$0xff]
        %v2052 = vld [vmem:[#allocation2 + $0x8] sm:$0x3]
        %v2053 = vadd.f32 %v1891, %v1901
        %v2054 = vadd.f32 %v2053, %v1911
        %v2055 = vadd.f32 %v2054, %v1921
        %v2056 = vadd.f32 %v2055, %v1931
        %v2057 = vadd.f32 %v2056, %v1941
        %v2058 = vadd.f32 %v2057, %v1951
        %v2059 = vadd.f32 %v2058, %v1961
        %v2060 = vadd.f32 %v2059, %v1971
        %v2061 = vadd.f32 %v2060, %v1981
        %v2062 = vadd.f32 %v2061, %v1991
        %v2063 = vadd.f32 %v2062, %v2001
        %v2064 = vadd.f32 %v2063, %v2011
        %v2065 = vadd.f32 %v2064, %v2021
        %v2066 = vadd.f32 %v2065, %v2031
        %v2067 = vadd.f32 %v2066, %v2041
        %v2068 = vrot.slane %v2067, 4
        %v2069 = vadd.f32 %v2067, %v2068
        %v2070 = vrot.slane %v2069, 2
        %v2071 = vadd.f32 %v2069, %v2070
        %v2072 = vrot.slane %v2071, 1
        %v2073 = vadd.f32 %v2071, %v2072
        %v2074 = vadd.f32 %v1892, %v1902
        %v2075 = vadd.f32 %v2074, %v1912
        %v2076 = vadd.f32 %v2075, %v1922
        %v2077 = vadd.f32 %v2076, %v1932
        %v2078 = vadd.f32 %v2077, %v1942
        %v2079 = vadd.f32 %v2078, %v1952
        %v2080 = vadd.f32 %v2079, %v1962
        %v2081 = vadd.f32 %v2080, %v1972
        %v2082 = vadd.f32 %v2081, %v1982
        %v2083 = vadd.f32 %v2082, %v1992
        %v2084 = vadd.f32 %v2083, %v2002
        %v2085 = vadd.f32 %v2084, %v2012
        %v2086 = vadd.f32 %v2085, %v2022
        %v2087 = vadd.f32 %v2086, %v2032
        %v2088 = vadd.f32 %v2087, %v2042
        %v2089 = vrot.slane %v2088, 4
        %v2090 = vadd.f32 %v2088, %v2089
        %v2091 = vrot.slane %v2090, 2
        %v2092 = vadd.f32 %v2090, %v2091
        %v2093 = vrot.slane %v2092, 1
        %v2094 = vadd.f32 %v2092, %v2093
        %v2095 = vadd.f32 %v1893, %v1903
        %v2096 = vadd.f32 %v2095, %v1913
        %v2097 = vadd.f32 %v2096, %v1923
        %v2098 = vadd.f32 %v2097, %v1933
        %v2099 = vadd.f32 %v2098, %v1943
        %v2100 = vadd.f32 %v2099, %v1953
        %v2101 = vadd.f32 %v2100, %v1963
        %v2102 = vadd.f32 %v2101, %v1973
        %v2103 = vadd.f32 %v2102, %v1983
        %v2104 = vadd.f32 %v2103, %v1993
        %v2105 = vadd.f32 %v2104, %v2003
        %v2106 = vadd.f32 %v2105, %v2013
        %v2107 = vadd.f32 %v2106, %v2023
        %v2108 = vadd.f32 %v2107, %v2033
        %v2109 = vadd.f32 %v2108, %v2043
        %v2110 = vrot.slane %v2109, 4
        %v2111 = vadd.f32 %v2109, %v2110
        %v2112 = vrot.slane %v2111, 2
        %v2113 = vadd.f32 %v2111, %v2112
        %v2114 = vrot.slane %v2113, 1
        %v2115 = vadd.f32 %v2113, %v2114
        %v2116 = vadd.f32 %v1894, %v1904
        %v2117 = vadd.f32 %v2116, %v1914
        %v2118 = vadd.f32 %v2117, %v1924
        %v2119 = vadd.f32 %v2118, %v1934
        %v2120 = vadd.f32 %v2119, %v1944
        %v2121 = vadd.f32 %v2120, %v1954
        %v2122 = vadd.f32 %v2121, %v1964
        %v2123 = vadd.f32 %v2122, %v1974
        %v2124 = vadd.f32 %v2123, %v1984
        %v2125 = vadd.f32 %v2124, %v1994
        %v2126 = vadd.f32 %v2125, %v2004
        %v2127 = vadd.f32 %v2126, %v2014
        %v2128 = vadd.f32 %v2127, %v2024
        %v2129 = vadd.f32 %v2128, %v2034
        %v2130 = vadd.f32 %v2129, %v2044
        %v2131 = vrot.slane %v2130, 4
        %v2132 = vadd.f32 %v2130, %v2131
        %v2133 = vrot.slane %v2132, 2
        %v2134 = vadd.f32 %v2132, %v2133
        %v2135 = vrot.slane %v2134, 1
        %v2136 = vadd.f32 %v2134, %v2135
        %v2137 = vadd.f32 %v1895, %v1905
        %v2138 = vadd.f32 %v2137, %v1915
        %v2139 = vadd.f32 %v2138, %v1925
        %v2140 = vadd.f32 %v2139, %v1935
        %v2141 = vadd.f32 %v2140, %v1945
        %v2142 = vadd.f32 %v2141, %v1955
        %v2143 = vadd.f32 %v2142, %v1965
        %v2144 = vadd.f32 %v2143, %v1975
        %v2145 = vadd.f32 %v2144, %v1985
        %v2146 = vadd.f32 %v2145, %v1995
        %v2147 = vadd.f32 %v2146, %v2005
        %v2148 = vadd.f32 %v2147, %v2015
        %v2149 = vadd.f32 %v2148, %v2025
        %v2150 = vadd.f32 %v2149, %v2035
        %v2151 = vadd.f32 %v2150, %v2045
        %v2152 = vrot.slane %v2151, 4
        %v2153 = vadd.f32 %v2151, %v2152
        %v2154 = vrot.slane %v2153, 2
        %v2155 = vadd.f32 %v2153, %v2154
        %v2156 = vrot.slane %v2155, 1
        %v2157 = vadd.f32 %v2155, %v2156
        %v2158 = vadd.f32 %v1896, %v1906
        %v2159 = vadd.f32 %v2158, %v1916
        %v2160 = vadd.f32 %v2159, %v1926
        %v2161 = vadd.f32 %v2160, %v1936
        %v2162 = vadd.f32 %v2161, %v1946
        %v2163 = vadd.f32 %v2162, %v1956
        %v2164 = vadd.f32 %v2163, %v1966
        %v2165 = vadd.f32 %v2164, %v1976
        %v2166 = vadd.f32 %v2165, %v1986
        %v2167 = vadd.f32 %v2166, %v1996
        %v2168 = vadd.f32 %v2167, %v2006
        %v2169 = vadd.f32 %v2168, %v2016
        %v2170 = vadd.f32 %v2169, %v2026
        %v2171 = vadd.f32 %v2170, %v2036
        %v2172 = vadd.f32 %v2171, %v2046
        %v2173 = vrot.slane %v2172, 4
        %v2174 = vadd.f32 %v2172, %v2173
        %v2175 = vrot.slane %v2174, 2
        %v2176 = vadd.f32 %v2174, %v2175
        %v2177 = vrot.slane %v2176, 1
        %v2178 = vadd.f32 %v2176, %v2177
        %v2179 = vadd.f32 %v1897, %v1907
        %v2180 = vadd.f32 %v2179, %v1917
        %v2181 = vadd.f32 %v2180, %v1927
        %v2182 = vadd.f32 %v2181, %v1937
        %v2183 = vadd.f32 %v2182, %v1947
        %v2184 = vadd.f32 %v2183, %v1957
        %v2185 = vadd.f32 %v2184, %v1967
        %v2186 = vadd.f32 %v2185, %v1977
        %v2187 = vadd.f32 %v2186, %v1987
        %v2188 = vadd.f32 %v2187, %v1997
        %v2189 = vadd.f32 %v2188, %v2007
        %v2190 = vadd.f32 %v2189, %v2017
        %v2191 = vadd.f32 %v2190, %v2027
        %v2192 = vadd.f32 %v2191, %v2037
        %v2193 = vadd.f32 %v2192, %v2047
        %v2194 = vrot.slane %v2193, 4
        %v2195 = vadd.f32 %v2193, %v2194
        %v2196 = vrot.slane %v2195, 2
        %v2197 = vadd.f32 %v2195, %v2196
        %v2198 = vrot.slane %v2197, 1
        %v2199 = vadd.f32 %v2197, %v2198
        %v2200 = vadd.f32 %v1898, %v1908
        %v2201 = vadd.f32 %v2200, %v1918
        %v2202 = vadd.f32 %v2201, %v1928
        %v2203 = vadd.f32 %v2202, %v1938
        %v2204 = vadd.f32 %v2203, %v1948
        %v2205 = vadd.f32 %v2204, %v1958
        %v2206 = vadd.f32 %v2205, %v1968
        %v2207 = vadd.f32 %v2206, %v1978
        %v2208 = vadd.f32 %v2207, %v1988
        %v2209 = vadd.f32 %v2208, %v1998
        %v2210 = vadd.f32 %v2209, %v2008
        %v2211 = vadd.f32 %v2210, %v2018
        %v2212 = vadd.f32 %v2211, %v2028
        %v2213 = vadd.f32 %v2212, %v2038
        %v2214 = vadd.f32 %v2213, %v2048
        %v2215 = vrot.slane %v2214, 4
        %v2216 = vadd.f32 %v2214, %v2215
        %v2217 = vrot.slane %v2216, 2
        %v2218 = vadd.f32 %v2216, %v2217
        %v2219 = vrot.slane %v2218, 1
        %v2220 = vadd.f32 %v2218, %v2219
        %v2221 = vadd.f32 %v1899, %v1909
        %v2222 = vadd.f32 %v2221, %v1919
        %v2223 = vadd.f32 %v2222, %v1929
        %v2224 = vadd.f32 %v2223, %v1939
        %v2225 = vadd.f32 %v2224, %v1949
        %v2226 = vadd.f32 %v2225, %v1959
        %v2227 = vadd.f32 %v2226, %v1969
        %v2228 = vadd.f32 %v2227, %v1979
        %v2229 = vadd.f32 %v2228, %v1989
        %v2230 = vadd.f32 %v2229, %v1999
        %v2231 = vadd.f32 %v2230, %v2009
        %v2232 = vadd.f32 %v2231, %v2019
        %v2233 = vadd.f32 %v2232, %v2029
        %v2234 = vadd.f32 %v2233, %v2039
        %v2235 = vadd.f32 %v2234, %v2049
        %v2236 = vrot.slane %v2235, 4
        %v2237 = vadd.f32 %v2235, %v2236
        %v2238 = vrot.slane %v2237, 2
        %v2239 = vadd.f32 %v2237, %v2238
        %v2240 = vrot.slane %v2239, 1
        %v2241 = vadd.f32 %v2239, %v2240
        %v2242 = vadd.f32 %v1900, %v1910
        %v2243 = vadd.f32 %v2242, %v1920
        %v2244 = vadd.f32 %v2243, %v1930
        %v2245 = vadd.f32 %v2244, %v1940
        %v2246 = vadd.f32 %v2245, %v1950
        %v2247 = vadd.f32 %v2246, %v1960
        %v2248 = vadd.f32 %v2247, %v1970
        %v2249 = vadd.f32 %v2248, %v1980
        %v2250 = vadd.f32 %v2249, %v1990
        %v2251 = vadd.f32 %v2250, %v2000
        %v2252 = vadd.f32 %v2251, %v2010
        %v2253 = vadd.f32 %v2252, %v2020
        %v2254 = vadd.f32 %v2253, %v2030
        %v2255 = vadd.f32 %v2254, %v2040
        %v2256 = vadd.f32 %v2255, %v2050
        %v2257 = vrot.slane %v2256, 4
        %v2258 = vadd.f32 %v2256, %v2257
        %v2259 = vrot.slane %v2258, 2
        %v2260 = vadd.f32 %v2258, %v2259
        %v2261 = vrot.slane %v2260, 1
        %v2262 = vadd.f32 %v2260, %v2261
        %v2273 = vcombine.low %v2073, %v2094
        %v2274 = vcombine.low %v2115, %v2136
        %v2275 = vcombine.low %v2157, %v2178
        %v2276 = vcombine.low %v2199, %v2220
        %v2278 = vunpack.c.l.s4 1966171168
        %v2279 = vunpack.c.0.s8 %v2278
        %v2280 = vlaneseq
        %v2281 = vshrl.u32 %v2280, 7
        %v2282 = vsub.s32 %v2279, %v2281
        %v2283 = vrot.slane %v2273, %v2282
        %v2285 = vunpack.c.l.s4 1966171168
        %v2286 = vunpack.c.0.s8 %v2285
        %v2287 = vlaneseq
        %v2288 = vshrl.u32 %v2287, 7
        %v2289 = vsub.s32 %v2286, %v2288
        %v2290 = vrot.slane %v2274, %v2289
        %v2292 = vunpack.c.l.s4 1966171168
        %v2293 = vunpack.c.0.s8 %v2292
        %v2294 = vlaneseq
        %v2295 = vshrl.u32 %v2294, 7
        %v2296 = vsub.s32 %v2293, %v2295
        %v2297 = vrot.slane %v2275, %v2296
        %v2299 = vunpack.c.l.s4 1966171168
        %v2300 = vunpack.c.0.s8 %v2299
        %v2301 = vlaneseq
        %v2302 = vshrl.u32 %v2301, 7
        %v2303 = vsub.s32 %v2300, %v2302
        %v2304 = vrot.slane %v2276, %v2303
        %v2305 = vcombine.low %v2283, %v2290
        %v2306 = vcombine.low %v2297, %v2304
        %v2308 = vunpack.c.l.s4 1966171168
        %v2309 = vunpack.c.0.s8 %v2308
        %v2310 = vlaneseq
        %v2311 = vshrl.u32 %v2310, 7
        %v2312 = vsub.s32 %v2309, %v2311
        %v2313 = vrot.slane %v2305, %v2312
        %v2315 = vunpack.c.l.s4 1966171168
        %v2316 = vunpack.c.0.s8 %v2315
        %v2317 = vlaneseq
        %v2318 = vshrl.u32 %v2317, 7
        %v2319 = vsub.s32 %v2316, %v2318
        %v2320 = vrot.slane %v2306, %v2319
        %v2321 = vcombine.low %v2313, %v2320
        %v2322 = vcombine.low %v2241, %v2262
        %v2324 = vunpack.c.l.s4 1966171168
        %v2325 = vunpack.c.0.s8 %v2324
        %v2326 = vlaneseq
        %v2327 = vshrl.u32 %v2326, 7
        %v2328 = vsub.s32 %v2325, %v2327
        %v2329 = vrot.slane %v2322, %v2328
        %v2331 = vunpack.c.l.s4 1966171168
        %v2332 = vunpack.c.0.s8 %v2331
        %v2333 = vlaneseq
        %v2334 = vshrl.u32 %v2333, 7
        %v2335 = vsub.s32 %v2332, %v2334
        %v2336 = vrot.slane %v2329, %v2335
        %v2339 = vadd.f32 %v2051, %v2321
        %v2340 = vadd.f32 %v2052, %v2336
        %2341 = vst [vmem:[#allocation2] sm:$0xff] %v2339
        %v2342 = vlaneseq
        %vm2343 = vcmp.ge.s32.totalorder %v2342, 0
        %vm2344 = vcmp.lt.s32.totalorder %v2342, 256
        %vm2345 = vmand %vm2343, %vm2344
        %2346 = vst.msk [vmem:[#allocation2 + $0x8] sm:$0x3] %vm2345, %v2340
        %p2347 = scmp.eq.s32.totalorder %s26, 1
        // Predicated region
        $region49: #{tpu_custom_call.1} parent=31 // pred_check
          %p2348 = pneg %p2347
        $region50: #{tpu_custom_call.1} parent=31 // pred_check_branch
          %2350 = sbr.rel (%p2348) target = $region52
        $region51: #{tpu_custom_call.1} parent=31 // pred_region
          %v2351 = vld [vmem:[#allocation2] sm:$0xff]
          %v2352 = vld [vmem:[#allocation2 + $0x8] sm:$0x3]
          %v2353 = vmul.f32 %v2351, 0.00390625
          %v2354 = vmul.f32 %v2352, 0.00390625
          %v2355 = vmul.f32 %v2353, %v2353
          %v2356 = vmul.f32 %v2354, %v2354
          %v2359 = vlaneseq
          %v2360 = vshrl.u32 %v2359, 7
          %v2361 = vsub.s32 0, %v2360
          %v2362 = vrot.slane %v2355, %v2361
          %v2363 = vlaneseq
          %v2364 = vshrl.u32 %v2363, 7
          %v2365 = vsub.s32 1, %v2364
          %v2366 = vrot.slane %v2355, %v2365
          %v2367 = vlaneseq
          %v2368 = vshrl.u32 %v2367, 7
          %v2369 = vsub.s32 2, %v2368
          %v2370 = vrot.slane %v2355, %v2369
          %v2371 = vlaneseq
          %v2372 = vshrl.u32 %v2371, 7
          %v2373 = vsub.s32 3, %v2372
          %v2374 = vrot.slane %v2355, %v2373
          %v2375 = vlaneseq
          %v2376 = vshrl.u32 %v2375, 7
          %v2377 = vsub.s32 4, %v2376
          %v2378 = vrot.slane %v2355, %v2377
          %v2379 = vlaneseq
          %v2380 = vshrl.u32 %v2379, 7
          %v2381 = vsub.s32 5, %v2380
          %v2382 = vrot.slane %v2355, %v2381
          %v2383 = vlaneseq
          %v2384 = vshrl.u32 %v2383, 7
          %v2385 = vsub.s32 6, %v2384
          %v2386 = vrot.slane %v2355, %v2385
          %v2387 = vlaneseq
          %v2388 = vshrl.u32 %v2387, 7
          %v2389 = vsub.s32 7, %v2388
          %v2390 = vrot.slane %v2355, %v2389
          %v2391 = vlaneseq
          %v2392 = vshrl.u32 %v2391, 7
          %v2393 = vsub.s32 0, %v2392
          %v2394 = vrot.slane %v2356, %v2393
          %v2395 = vlaneseq
          %v2396 = vshrl.u32 %v2395, 7
          %v2397 = vsub.s32 1, %v2396
          %v2398 = vrot.slane %v2356, %v2397
          %vm2409 = vcmask 1040384
          %v2410 = vsel %vm2409, %v2362, 0.0
          %v2411 = vsel %vm2409, %v2366, 0.0
          %v2412 = vadd.f32 %v2410, %v2411
          %v2413 = vsel %vm2409, %v2370, 0.0
          %v2414 = vadd.f32 %v2412, %v2413
          %v2415 = vsel %vm2409, %v2374, 0.0
          %v2416 = vadd.f32 %v2414, %v2415
          %v2417 = vsel %vm2409, %v2378, 0.0
          %v2418 = vadd.f32 %v2416, %v2417
          %v2419 = vsel %vm2409, %v2382, 0.0
          %v2420 = vadd.f32 %v2418, %v2419
          %v2421 = vsel %vm2409, %v2386, 0.0
          %v2422 = vadd.f32 %v2420, %v2421
          %v2423 = vsel %vm2409, %v2390, 0.0
          %v2424 = vadd.f32 %v2422, %v2423
          %v2425 = vsel %vm2409, %v2394, 0.0
          %v2426 = vadd.f32 %v2424, %v2425
          %v2427 = vsel %vm2409, %v2398, 0.0
          %v2428 = vadd.f32 %v2426, %v2427
          %2429 = vadd.xlane.f32.xlu0 %v2428
          %v2430 = vpop.xlane.xlu0 %2429
          %v2431 = vmax.f32 %v2430, 1e-16
          %v2432 = vrsqrt.pop %v2431
          %v2434 = vlaneseq
          %v2435 = vshrl.u32 %v2434, 7
          %v2436 = vsub.s32 0, %v2435
          %v2437 = vrot.slane %v2432, %v2436
          %v2439 = vmul.f32 %v2353, %v2437
          %v2440 = vmul.f32 %v2354, %v2437
          %v2441 = vld [vmem:[#allocation8] sm:$0xff]
          %v2442 = vld [vmem:[#allocation8 + $0x8] sm:$0xff]
          %v2443 = vld [vmem:[#allocation8 + $0x10] sm:$0xff]
          %v2444 = vld [vmem:[#allocation8 + $0x18] sm:$0xff]
          %v2445 = vld [vmem:[#allocation8 + $0x20] sm:$0xff]
          %v2446 = vld [vmem:[#allocation8 + $0x28] sm:$0xff]
          %v2447 = vld [vmem:[#allocation8 + $0x30] sm:$0xff]
          %v2448 = vld [vmem:[#allocation8 + $0x38] sm:$0xff]
          %v2449 = vld [vmem:[#allocation8 + $0x40] sm:$0xff]
          %v2450 = vld [vmem:[#allocation8 + $0x48] sm:$0xff]
          %v2451 = vld [vmem:[#allocation8 + $0x50] sm:$0xff]
          %v2452 = vld [vmem:[#allocation8 + $0x58] sm:$0xff]
          %v2453 = vld [vmem:[#allocation8 + $0x60] sm:$0xff]
          %v2454 = vld [vmem:[#allocation8 + $0x68] sm:$0xff]
          %v2455 = vld [vmem:[#allocation8 + $0x70] sm:$0xff]
          %v2456 = vld [vmem:[#allocation8 + $0x78] sm:$0xff]
          %v2457 = vld [vmem:[#allocation8 + $0x80] sm:$0xff]
          %v2458 = vld [vmem:[#allocation8 + $0x88] sm:$0xff]
          %v2459 = vld [vmem:[#allocation8 + $0x90] sm:$0xff]
          %v2460 = vld [vmem:[#allocation8 + $0x98] sm:$0xff]
          %v2461 = vld [vmem:[#allocation8 + $0xa0] sm:$0xff]
          %v2462 = vld [vmem:[#allocation8 + $0xa8] sm:$0xff]
          %v2463 = vld [vmem:[#allocation8 + $0xb0] sm:$0xff]
          %v2464 = vld [vmem:[#allocation8 + $0xb8] sm:$0xff]
          %v2465 = vld [vmem:[#allocation8 + $0xc0] sm:$0xff]
          %v2466 = vld [vmem:[#allocation8 + $0xc8] sm:$0xff]
          %v2467 = vld [vmem:[#allocation8 + $0xd0] sm:$0xff]
          %v2468 = vld [vmem:[#allocation8 + $0xd8] sm:$0xff]
          %v2469 = vld [vmem:[#allocation8 + $0xe0] sm:$0xff]
          %v2470 = vld [vmem:[#allocation8 + $0xe8] sm:$0xff]
          %v2471 = vld [vmem:[#allocation8 + $0xf0] sm:$0xff]
          %v2472 = vld [vmem:[#allocation8 + $0xf8] sm:$0xff]
          %v2473 = vld [vmem:[#allocation8 + $0x100] sm:$0xff]
          %v2474 = vld [vmem:[#allocation8 + $0x108] sm:$0xff]
          %v2475 = vld [vmem:[#allocation8 + $0x110] sm:$0xff]
          %v2476 = vld [vmem:[#allocation8 + $0x118] sm:$0xff]
          %v2477 = vld [vmem:[#allocation8 + $0x120] sm:$0xff]
          %v2478 = vld [vmem:[#allocation8 + $0x128] sm:$0xff]
          %v2479 = vld [vmem:[#allocation8 + $0x130] sm:$0xff]
          %v2480 = vld [vmem:[#allocation8 + $0x138] sm:$0xff]
          %v2481 = vld [vmem:[#allocation8 + $0x140] sm:$0xff]
          %v2482 = vld [vmem:[#allocation8 + $0x148] sm:$0xff]
          %v2483 = vld [vmem:[#allocation8 + $0x150] sm:$0xff]
          %v2484 = vld [vmem:[#allocation8 + $0x158] sm:$0xff]
          %v2485 = vld [vmem:[#allocation8 + $0x160] sm:$0xff]
          %v2486 = vld [vmem:[#allocation8 + $0x168] sm:$0xff]
          %v2487 = vld [vmem:[#allocation8 + $0x170] sm:$0xff]
          %v2488 = vld [vmem:[#allocation8 + $0x178] sm:$0xff]
          %v2489 = vld [vmem:[#allocation8 + $0x180] sm:$0xff]
          %v2490 = vld [vmem:[#allocation8 + $0x188] sm:$0xff]
          %v2491 = vld [vmem:[#allocation8 + $0x190] sm:$0xff]
          %v2492 = vld [vmem:[#allocation8 + $0x198] sm:$0xff]
          %v2493 = vld [vmem:[#allocation8 + $0x1a0] sm:$0xff]
          %v2494 = vld [vmem:[#allocation8 + $0x1a8] sm:$0xff]
          %v2495 = vld [vmem:[#allocation8 + $0x1b0] sm:$0xff]
          %v2496 = vld [vmem:[#allocation8 + $0x1b8] sm:$0xff]
          %v2497 = vld [vmem:[#allocation8 + $0x1c0] sm:$0xff]
          %v2498 = vld [vmem:[#allocation8 + $0x1c8] sm:$0xff]
          %v2499 = vld [vmem:[#allocation8 + $0x1d0] sm:$0xff]
          %v2500 = vld [vmem:[#allocation8 + $0x1d8] sm:$0xff]
          %v2501 = vld [vmem:[#allocation8 + $0x1e0] sm:$0xff]
          %v2502 = vld [vmem:[#allocation8 + $0x1e8] sm:$0xff]
          %v2503 = vld [vmem:[#allocation8 + $0x1f0] sm:$0xff]
          %v2504 = vld [vmem:[#allocation8 + $0x1f8] sm:$0xff]
          %v2505 = vld [vmem:[#allocation8 + $0x200] sm:$0xff]
          %v2506 = vld [vmem:[#allocation8 + $0x208] sm:$0xff]
          %v2507 = vld [vmem:[#allocation8 + $0x210] sm:$0xff]
          %v2508 = vld [vmem:[#allocation8 + $0x218] sm:$0xff]
          %v2509 = vld [vmem:[#allocation8 + $0x220] sm:$0xff]
          %v2510 = vld [vmem:[#allocation8 + $0x228] sm:$0xff]
          %v2511 = vld [vmem:[#allocation8 + $0x230] sm:$0xff]
          %v2512 = vld [vmem:[#allocation8 + $0x238] sm:$0xff]
          %v2513 = vld [vmem:[#allocation8 + $0x240] sm:$0xff]
          %v2514 = vld [vmem:[#allocation8 + $0x248] sm:$0xff]
          %v2515 = vld [vmem:[#allocation8 + $0x250] sm:$0xff]
          %v2516 = vld [vmem:[#allocation8 + $0x258] sm:$0xff]
          %v2517 = vld [vmem:[#allocation8 + $0x260] sm:$0xff]
          %v2518 = vld [vmem:[#allocation8 + $0x268] sm:$0xff]
          %v2519 = vld [vmem:[#allocation8 + $0x270] sm:$0xff]
          %v2520 = vld [vmem:[#allocation8 + $0x278] sm:$0xff]
          %v2521 = vld [vmem:[#allocation8 + $0x280] sm:$0xff]
          %v2522 = vld [vmem:[#allocation8 + $0x288] sm:$0xff]
          %v2523 = vld [vmem:[#allocation8 + $0x290] sm:$0xff]
          %v2524 = vld [vmem:[#allocation8 + $0x298] sm:$0xff]
          %v2525 = vld [vmem:[#allocation8 + $0x2a0] sm:$0xff]
          %v2526 = vld [vmem:[#allocation8 + $0x2a8] sm:$0xff]
          %v2527 = vld [vmem:[#allocation8 + $0x2b0] sm:$0xff]
          %v2528 = vld [vmem:[#allocation8 + $0x2b8] sm:$0xff]
          %v2529 = vld [vmem:[#allocation8 + $0x2c0] sm:$0xff]
          %v2530 = vld [vmem:[#allocation8 + $0x2c8] sm:$0xff]
          %v2531 = vld [vmem:[#allocation8 + $0x2d0] sm:$0xff]
          %v2532 = vld [vmem:[#allocation8 + $0x2d8] sm:$0xff]
          %v2533 = vld [vmem:[#allocation8 + $0x2e0] sm:$0xff]
          %v2534 = vld [vmem:[#allocation8 + $0x2e8] sm:$0xff]
          %v2535 = vld [vmem:[#allocation8 + $0x2f0] sm:$0xff]
          %v2536 = vld [vmem:[#allocation8 + $0x2f8] sm:$0xff]
          %v2537 = vld [vmem:[#allocation8 + $0x300] sm:$0xff]
          %v2538 = vld [vmem:[#allocation8 + $0x308] sm:$0xff]
          %v2539 = vld [vmem:[#allocation8 + $0x310] sm:$0xff]
          %v2540 = vld [vmem:[#allocation8 + $0x318] sm:$0xff]
          %v2541 = vld [vmem:[#allocation8 + $0x320] sm:$0xff]
          %v2542 = vld [vmem:[#allocation8 + $0x328] sm:$0xff]
          %v2543 = vld [vmem:[#allocation8 + $0x330] sm:$0xff]
          %v2544 = vld [vmem:[#allocation8 + $0x338] sm:$0xff]
          %v2545 = vld [vmem:[#allocation8 + $0x340] sm:$0xff]
          %v2546 = vld [vmem:[#allocation8 + $0x348] sm:$0xff]
          %v2547 = vld [vmem:[#allocation8 + $0x350] sm:$0xff]
          %v2548 = vld [vmem:[#allocation8 + $0x358] sm:$0xff]
          %v2549 = vld [vmem:[#allocation8 + $0x360] sm:$0xff]
          %v2550 = vld [vmem:[#allocation8 + $0x368] sm:$0xff]
          %v2551 = vld [vmem:[#allocation8 + $0x370] sm:$0xff]
          %v2552 = vld [vmem:[#allocation8 + $0x378] sm:$0xff]
          %v2553 = vld [vmem:[#allocation8 + $0x380] sm:$0xff]
          %v2554 = vld [vmem:[#allocation8 + $0x388] sm:$0xff]
          %v2555 = vld [vmem:[#allocation8 + $0x390] sm:$0xff]
          %v2556 = vld [vmem:[#allocation8 + $0x398] sm:$0xff]
          %v2557 = vld [vmem:[#allocation8 + $0x3a0] sm:$0xff]
          %v2558 = vld [vmem:[#allocation8 + $0x3a8] sm:$0xff]
          %v2559 = vld [vmem:[#allocation8 + $0x3b0] sm:$0xff]
          %v2560 = vld [vmem:[#allocation8 + $0x3b8] sm:$0xff]
          %v2561 = vld [vmem:[#allocation8 + $0x3c0] sm:$0xff]
          %v2562 = vld [vmem:[#allocation8 + $0x3c8] sm:$0xff]
          %v2563 = vld [vmem:[#allocation8 + $0x3d0] sm:$0xff]
          %v2564 = vld [vmem:[#allocation8 + $0x3d8] sm:$0xff]
          %v2565 = vld [vmem:[#allocation8 + $0x3e0] sm:$0xff]
          %v2566 = vld [vmem:[#allocation8 + $0x3e8] sm:$0xff]
          %v2567 = vld [vmem:[#allocation8 + $0x3f0] sm:$0xff]
          %v2568 = vld [vmem:[#allocation8 + $0x3f8] sm:$0xff]
          %v2569 = vld [vmem:[#allocation8 + $0x400] sm:$0xff]
          %v2570 = vld [vmem:[#allocation8 + $0x408] sm:$0xff]
          %v2571 = vld [vmem:[#allocation8 + $0x410] sm:$0xff]
          %v2572 = vld [vmem:[#allocation8 + $0x418] sm:$0xff]
          %v2573 = vld [vmem:[#allocation8 + $0x420] sm:$0xff]
          %v2574 = vld [vmem:[#allocation8 + $0x428] sm:$0xff]
          %v2575 = vld [vmem:[#allocation8 + $0x430] sm:$0xff]
          %v2576 = vld [vmem:[#allocation8 + $0x438] sm:$0xff]
          %v2577 = vld [vmem:[#allocation8 + $0x440] sm:$0xff]
          %v2578 = vld [vmem:[#allocation8 + $0x448] sm:$0xff]
          %v2579 = vld [vmem:[#allocation8 + $0x450] sm:$0xff]
          %v2580 = vld [vmem:[#allocation8 + $0x458] sm:$0xff]
          %v2581 = vld [vmem:[#allocation8 + $0x460] sm:$0xff]
          %v2582 = vld [vmem:[#allocation8 + $0x468] sm:$0xff]
          %v2583 = vld [vmem:[#allocation8 + $0x470] sm:$0xff]
          %v2584 = vld [vmem:[#allocation8 + $0x478] sm:$0xff]
          %v2585 = vld [vmem:[#allocation8 + $0x480] sm:$0xff]
          %v2586 = vld [vmem:[#allocation8 + $0x488] sm:$0xff]
          %v2587 = vld [vmem:[#allocation8 + $0x490] sm:$0xff]
          %v2588 = vld [vmem:[#allocation8 + $0x498] sm:$0xff]
          %v2589 = vld [vmem:[#allocation8 + $0x4a0] sm:$0xff]
          %v2590 = vld [vmem:[#allocation8 + $0x4a8] sm:$0xff]
          %v2591 = vld [vmem:[#allocation8 + $0x4b0] sm:$0xff]
          %v2592 = vld [vmem:[#allocation8 + $0x4b8] sm:$0xff]
          %v2593 = vld [vmem:[#allocation8 + $0x4c0] sm:$0xff]
          %v2594 = vld [vmem:[#allocation8 + $0x4c8] sm:$0xff]
          %v2595 = vld [vmem:[#allocation8 + $0x4d0] sm:$0xff]
          %v2596 = vld [vmem:[#allocation8 + $0x4d8] sm:$0xff]
          %v2597 = vld [vmem:[#allocation8 + $0x4e0] sm:$0xff]
          %v2598 = vld [vmem:[#allocation8 + $0x4e8] sm:$0xff]
          %v2599 = vld [vmem:[#allocation8 + $0x4f0] sm:$0xff]
          %v2600 = vld [vmem:[#allocation8 + $0x4f8] sm:$0xff]
          %v2603 = vlaneseq
          %v2604 = vshrl.u32 %v2603, 7
          %v2605 = vsub.s32 0, %v2604
          %v2606 = vrot.slane %v2439, %v2605
          %v2607 = vlaneseq
          %v2608 = vshrl.u32 %v2607, 7
          %v2609 = vsub.s32 1, %v2608
          %v2610 = vrot.slane %v2439, %v2609
          %v2611 = vlaneseq
          %v2612 = vshrl.u32 %v2611, 7
          %v2613 = vsub.s32 2, %v2612
          %v2614 = vrot.slane %v2439, %v2613
          %v2615 = vlaneseq
          %v2616 = vshrl.u32 %v2615, 7
          %v2617 = vsub.s32 3, %v2616
          %v2618 = vrot.slane %v2439, %v2617
          %v2619 = vlaneseq
          %v2620 = vshrl.u32 %v2619, 7
          %v2621 = vsub.s32 4, %v2620
          %v2622 = vrot.slane %v2439, %v2621
          %v2623 = vlaneseq
          %v2624 = vshrl.u32 %v2623, 7
          %v2625 = vsub.s32 5, %v2624
          %v2626 = vrot.slane %v2439, %v2625
          %v2627 = vlaneseq
          %v2628 = vshrl.u32 %v2627, 7
          %v2629 = vsub.s32 6, %v2628
          %v2630 = vrot.slane %v2439, %v2629
          %v2631 = vlaneseq
          %v2632 = vshrl.u32 %v2631, 7
          %v2633 = vsub.s32 7, %v2632
          %v2634 = vrot.slane %v2439, %v2633
          %v2635 = vlaneseq
          %v2636 = vshrl.u32 %v2635, 7
          %v2637 = vsub.s32 0, %v2636
          %v2638 = vrot.slane %v2440, %v2637
          %v2639 = vlaneseq
          %v2640 = vshrl.u32 %v2639, 7
          %v2641 = vsub.s32 1, %v2640
          %v2642 = vrot.slane %v2440, %v2641
          %2653 = vmatprep.subr.mxu0 0.0
          %2654 = vmatpush1.msra.mxu0 %v2456
          %2655 = vmatprep.subr.mxu0 0.0
          %2656 = vmatpush1.msra.mxu0 %v2455
          %2657 = vmatprep.subr.mxu0 0.0
          %2658 = vmatpush1.msra.mxu0 %v2454
          %2659 = vmatprep.subr.mxu0 0.0
          %2660 = vmatpush1.msra.mxu0 %v2453
          %2661 = vmatprep.subr.mxu0 0.0
          %2662 = vmatpush1.msra.mxu0 %v2452
          %2663 = vmatprep.subr.mxu0 0.0
          %2664 = vmatpush1.msra.mxu0 %v2451
          %2665 = vmatprep.subr.mxu0 0.0
          %2666 = vmatpush1.msra.mxu0 %v2450
          %2667 = vmatprep.subr.mxu0 0.0
          %2668 = vmatpush1.msra.mxu0 %v2449
          %2669 = vmatprep.subr.mxu0 0.0
          %2670 = vmatpush1.msra.mxu0 %v2448
          %2671 = vmatprep.subr.mxu0 0.0
          %2672 = vmatpush1.msra.mxu0 %v2447
          %2673 = vmatprep.subr.mxu0 0.0
          %2674 = vmatpush1.msra.mxu0 %v2446
          %2675 = vmatprep.subr.mxu0 0.0
          %2676 = vmatpush1.msra.mxu0 %v2445
          %2677 = vmatprep.subr.mxu0 0.0
          %2678 = vmatpush1.msra.mxu0 %v2444
          %2679 = vmatprep.subr.mxu0 0.0
          %2680 = vmatpush1.msra.mxu0 %v2443
          %2681 = vmatprep.subr.mxu0 0.0
          %2682 = vmatpush1.msra.mxu0 %v2442
          %2683 = vmatprep.subr.mxu0 0.0
          %2684 = vmatpush1.msra.mxu0 %v2441
          %2685 = vmatprep.subr.mxu0 0.0
          %2686 = vmatpush2.msra.mxu0 %v2472
          %2687 = vmatprep.subr.mxu0 0.0
          %2688 = vmatpush2.msra.mxu0 %v2471
          %2689 = vmatprep.subr.mxu0 0.0
          %2690 = vmatpush2.msra.mxu0 %v2470
          %2691 = vmatprep.subr.mxu0 0.0
          %2692 = vmatpush2.msra.mxu0 %v2469
          %2693 = vmatprep.subr.mxu0 0.0
          %2694 = vmatpush2.msra.mxu0 %v2468
          %2695 = vmatprep.subr.mxu0 0.0
          %2696 = vmatpush2.msra.mxu0 %v2467
          %2697 = vmatprep.subr.mxu0 0.0
          %2698 = vmatpush2.msra.mxu0 %v2466
          %2699 = vmatprep.subr.mxu0 0.0
          %2700 = vmatpush2.msra.mxu0 %v2465
          %2701 = vmatprep.subr.mxu0 0.0
          %2702 = vmatpush2.msra.mxu0 %v2464
          %2703 = vmatprep.subr.mxu0 0.0
          %2704 = vmatpush2.msra.mxu0 %v2463
          %2705 = vmatprep.subr.mxu0 0.0
          %2706 = vmatpush2.msra.mxu0 %v2462
          %2707 = vmatprep.subr.mxu0 0.0
          %2708 = vmatpush2.msra.mxu0 %v2461
          %2709 = vmatprep.subr.mxu0 0.0
          %2710 = vmatpush2.msra.mxu0 %v2460
          %2711 = vmatprep.subr.mxu0 0.0
          %2712 = vmatpush2.msra.mxu0 %v2459
          %2713 = vmatprep.subr.mxu0 0.0
          %2714 = vmatpush2.msra.mxu0 %v2458
          %2715 = vmatprep.subr.mxu0 0.0
          %2716 = vmatpush2.msra.mxu0 %v2457
          %2717 = vmatprep.mubr.f32.mxu0 %v2610
          %2718 = vmatmul.mubr.f32.gmra.mxu0 %v2606
          %v2719 = vpop.f32.mrf.mxu0
          %v2720 = vadd.f32 0.0, %v2719
          %v2721 = vpop.f32.mrf.mxu0
          %2722 = vdwg.mxu0
          %2723 = vmatprep.subr.mxu0 0.0
          %2724 = vmatpush1.msra.mxu0 %v2488
          %2725 = vmatprep.subr.mxu0 0.0
          %2726 = vmatpush1.msra.mxu0 %v2487
          %2727 = vmatprep.subr.mxu0 0.0
          %2728 = vmatpush1.msra.mxu0 %v2486
          %2729 = vmatprep.subr.mxu0 0.0
          %2730 = vmatpush1.msra.mxu0 %v2485
          %2731 = vmatprep.subr.mxu0 0.0
          %2732 = vmatpush1.msra.mxu0 %v2484
          %2733 = vmatprep.subr.mxu0 0.0
          %2734 = vmatpush1.msra.mxu0 %v2483
          %2735 = vmatprep.subr.mxu0 0.0
          %2736 = vmatpush1.msra.mxu0 %v2482
          %2737 = vmatprep.subr.mxu0 0.0
          %2738 = vmatpush1.msra.mxu0 %v2481
          %2739 = vmatprep.subr.mxu0 0.0
          %2740 = vmatpush1.msra.mxu0 %v2480
          %2741 = vmatprep.subr.mxu0 0.0
          %2742 = vmatpush1.msra.mxu0 %v2479
          %2743 = vmatprep.subr.mxu0 0.0
          %2744 = vmatpush1.msra.mxu0 %v2478
          %2745 = vmatprep.subr.mxu0 0.0
          %2746 = vmatpush1.msra.mxu0 %v2477
          %2747 = vmatprep.subr.mxu0 0.0
          %2748 = vmatpush1.msra.mxu0 %v2476
          %2749 = vmatprep.subr.mxu0 0.0
          %2750 = vmatpush1.msra.mxu0 %v2475
          %2751 = vmatprep.subr.mxu0 0.0
          %2752 = vmatpush1.msra.mxu0 %v2474
          %2753 = vmatprep.subr.mxu0 0.0
          %2754 = vmatpush1.msra.mxu0 %v2473
          %2755 = vmatprep.subr.mxu0 0.0
          %2756 = vmatpush2.msra.mxu0 %v2504
          %2757 = vmatprep.subr.mxu0 0.0
          %2758 = vmatpush2.msra.mxu0 %v2503
          %2759 = vmatprep.subr.mxu0 0.0
          %2760 = vmatpush2.msra.mxu0 %v2502
          %2761 = vmatprep.subr.mxu0 0.0
          %2762 = vmatpush2.msra.mxu0 %v2501
          %2763 = vmatprep.subr.mxu0 0.0
          %2764 = vmatpush2.msra.mxu0 %v2500
          %2765 = vmatprep.subr.mxu0 0.0
          %2766 = vmatpush2.msra.mxu0 %v2499
          %2767 = vmatprep.subr.mxu0 0.0
          %2768 = vmatpush2.msra.mxu0 %v2498
          %2769 = vmatprep.subr.mxu0 0.0
          %2770 = vmatpush2.msra.mxu0 %v2497
          %2771 = vmatprep.subr.mxu0 0.0
          %2772 = vmatpush2.msra.mxu0 %v2496
          %2773 = vmatprep.subr.mxu0 0.0
          %2774 = vmatpush2.msra.mxu0 %v2495
          %2775 = vmatprep.subr.mxu0 0.0
          %2776 = vmatpush2.msra.mxu0 %v2494
          %2777 = vmatprep.subr.mxu0 0.0
          %2778 = vmatpush2.msra.mxu0 %v2493
          %2779 = vmatprep.subr.mxu0 0.0
          %2780 = vmatpush2.msra.mxu0 %v2492
          %2781 = vmatprep.subr.mxu0 0.0
          %2782 = vmatpush2.msra.mxu0 %v2491
          %2783 = vmatprep.subr.mxu0 0.0
          %2784 = vmatpush2.msra.mxu0 %v2490
          %2785 = vmatprep.subr.mxu0 0.0
          %2786 = vmatpush2.msra.mxu0 %v2489
          %2787 = vmatprep.mubr.f32.mxu0 %v2618
          %2788 = vmatmul.mubr.f32.gmra.mxu0 %v2614
          %v2789 = vpop.f32.mrf.mxu0
          %v2790 = vadd.f32 %v2720, %v2789
          %v2791 = vpop.f32.mrf.mxu0
          %2792 = vdwg.mxu0
          %2793 = vmatprep.subr.mxu0 0.0
          %2794 = vmatpush1.msra.mxu0 %v2520
          %2795 = vmatprep.subr.mxu0 0.0
          %2796 = vmatpush1.msra.mxu0 %v2519
          %2797 = vmatprep.subr.mxu0 0.0
          %2798 = vmatpush1.msra.mxu0 %v2518
          %2799 = vmatprep.subr.mxu0 0.0
          %2800 = vmatpush1.msra.mxu0 %v2517
          %2801 = vmatprep.subr.mxu0 0.0
          %2802 = vmatpush1.msra.mxu0 %v2516
          %2803 = vmatprep.subr.mxu0 0.0
          %2804 = vmatpush1.msra.mxu0 %v2515
          %2805 = vmatprep.subr.mxu0 0.0
          %2806 = vmatpush1.msra.mxu0 %v2514
          %2807 = vmatprep.subr.mxu0 0.0
          %2808 = vmatpush1.msra.mxu0 %v2513
          %2809 = vmatprep.subr.mxu0 0.0
          %2810 = vmatpush1.msra.mxu0 %v2512
          %2811 = vmatprep.subr.mxu0 0.0
          %2812 = vmatpush1.msra.mxu0 %v2511
          %2813 = vmatprep.subr.mxu0 0.0
          %2814 = vmatpush1.msra.mxu0 %v2510
          %2815 = vmatprep.subr.mxu0 0.0
          %2816 = vmatpush1.msra.mxu0 %v2509
          %2817 = vmatprep.subr.mxu0 0.0
          %2818 = vmatpush1.msra.mxu0 %v2508
          %2819 = vmatprep.subr.mxu0 0.0
          %2820 = vmatpush1.msra.mxu0 %v2507
          %2821 = vmatprep.subr.mxu0 0.0
          %2822 = vmatpush1.msra.mxu0 %v2506
          %2823 = vmatprep.subr.mxu0 0.0
          %2824 = vmatpush1.msra.mxu0 %v2505
          %2825 = vmatprep.subr.mxu0 0.0
          %2826 = vmatpush2.msra.mxu0 %v2536
          %2827 = vmatprep.subr.mxu0 0.0
          %2828 = vmatpush2.msra.mxu0 %v2535
          %2829 = vmatprep.subr.mxu0 0.0
          %2830 = vmatpush2.msra.mxu0 %v2534
          %2831 = vmatprep.subr.mxu0 0.0
          %2832 = vmatpush2.msra.mxu0 %v2533
          %2833 = vmatprep.subr.mxu0 0.0
          %2834 = vmatpush2.msra.mxu0 %v2532
          %2835 = vmatprep.subr.mxu0 0.0
          %2836 = vmatpush2.msra.mxu0 %v2531
          %2837 = vmatprep.subr.mxu0 0.0
          %2838 = vmatpush2.msra.mxu0 %v2530
          %2839 = vmatprep.subr.mxu0 0.0
          %2840 = vmatpush2.msra.mxu0 %v2529
          %2841 = vmatprep.subr.mxu0 0.0
          %2842 = vmatpush2.msra.mxu0 %v2528
          %2843 = vmatprep.subr.mxu0 0.0
          %2844 = vmatpush2.msra.mxu0 %v2527
          %2845 = vmatprep.subr.mxu0 0.0
          %2846 = vmatpush2.msra.mxu0 %v2526
          %2847 = vmatprep.subr.mxu0 0.0
          %2848 = vmatpush2.msra.mxu0 %v2525
          %2849 = vmatprep.subr.mxu0 0.0
          %2850 = vmatpush2.msra.mxu0 %v2524
          %2851 = vmatprep.subr.mxu0 0.0
          %2852 = vmatpush2.msra.mxu0 %v2523
          %2853 = vmatprep.subr.mxu0 0.0
          %2854 = vmatpush2.msra.mxu0 %v2522
          %2855 = vmatprep.subr.mxu0 0.0
          %2856 = vmatpush2.msra.mxu0 %v2521
          %2857 = vmatprep.mubr.f32.mxu0 %v2626
          %2858 = vmatmul.mubr.f32.gmra.mxu0 %v2622
          %v2859 = vpop.f32.mrf.mxu0
          %v2860 = vadd.f32 %v2790, %v2859
          %v2861 = vpop.f32.mrf.mxu0
          %2862 = vdwg.mxu0
          %2863 = vmatprep.subr.mxu0 0.0
          %2864 = vmatpush1.msra.mxu0 %v2552
          %2865 = vmatprep.subr.mxu0 0.0
          %2866 = vmatpush1.msra.mxu0 %v2551
          %2867 = vmatprep.subr.mxu0 0.0
          %2868 = vmatpush1.msra.mxu0 %v2550
          %2869 = vmatprep.subr.mxu0 0.0
          %2870 = vmatpush1.msra.mxu0 %v2549
          %2871 = vmatprep.subr.mxu0 0.0
          %2872 = vmatpush1.msra.mxu0 %v2548
          %2873 = vmatprep.subr.mxu0 0.0
          %2874 = vmatpush1.msra.mxu0 %v2547
          %2875 = vmatprep.subr.mxu0 0.0
          %2876 = vmatpush1.msra.mxu0 %v2546
          %2877 = vmatprep.subr.mxu0 0.0
          %2878 = vmatpush1.msra.mxu0 %v2545
          %2879 = vmatprep.subr.mxu0 0.0
          %2880 = vmatpush1.msra.mxu0 %v2544
          %2881 = vmatprep.subr.mxu0 0.0
          %2882 = vmatpush1.msra.mxu0 %v2543
          %2883 = vmatprep.subr.mxu0 0.0
          %2884 = vmatpush1.msra.mxu0 %v2542
          %2885 = vmatprep.subr.mxu0 0.0
          %2886 = vmatpush1.msra.mxu0 %v2541
          %2887 = vmatprep.subr.mxu0 0.0
          %2888 = vmatpush1.msra.mxu0 %v2540
          %2889 = vmatprep.subr.mxu0 0.0
          %2890 = vmatpush1.msra.mxu0 %v2539
          %2891 = vmatprep.subr.mxu0 0.0
          %2892 = vmatpush1.msra.mxu0 %v2538
          %2893 = vmatprep.subr.mxu0 0.0
          %2894 = vmatpush1.msra.mxu0 %v2537
          %2895 = vmatprep.subr.mxu0 0.0
          %2896 = vmatpush2.msra.mxu0 %v2568
          %2897 = vmatprep.subr.mxu0 0.0
          %2898 = vmatpush2.msra.mxu0 %v2567
          %2899 = vmatprep.subr.mxu0 0.0
          %2900 = vmatpush2.msra.mxu0 %v2566
          %2901 = vmatprep.subr.mxu0 0.0
          %2902 = vmatpush2.msra.mxu0 %v2565
          %2903 = vmatprep.subr.mxu0 0.0
          %2904 = vmatpush2.msra.mxu0 %v2564
          %2905 = vmatprep.subr.mxu0 0.0
          %2906 = vmatpush2.msra.mxu0 %v2563
          %2907 = vmatprep.subr.mxu0 0.0
          %2908 = vmatpush2.msra.mxu0 %v2562
          %2909 = vmatprep.subr.mxu0 0.0
          %2910 = vmatpush2.msra.mxu0 %v2561
          %2911 = vmatprep.subr.mxu0 0.0
          %2912 = vmatpush2.msra.mxu0 %v2560
          %2913 = vmatprep.subr.mxu0 0.0
          %2914 = vmatpush2.msra.mxu0 %v2559
          %2915 = vmatprep.subr.mxu0 0.0
          %2916 = vmatpush2.msra.mxu0 %v2558
          %2917 = vmatprep.subr.mxu0 0.0
          %2918 = vmatpush2.msra.mxu0 %v2557
          %2919 = vmatprep.subr.mxu0 0.0
          %2920 = vmatpush2.msra.mxu0 %v2556
          %2921 = vmatprep.subr.mxu0 0.0
          %2922 = vmatpush2.msra.mxu0 %v2555
          %2923 = vmatprep.subr.mxu0 0.0
          %2924 = vmatpush2.msra.mxu0 %v2554
          %2925 = vmatprep.subr.mxu0 0.0
          %2926 = vmatpush2.msra.mxu0 %v2553
          %2927 = vmatprep.mubr.f32.mxu0 %v2634
          %2928 = vmatmul.mubr.f32.gmra.mxu0 %v2630
          %v2929 = vpop.f32.mrf.mxu0
          %v2930 = vadd.f32 %v2860, %v2929
          %v2931 = vpop.f32.mrf.mxu0
          %2932 = vdwg.mxu0
          %2933 = vmatprep.subr.mxu0 0.0
          %2934 = vmatpush1.msra.mxu0 %v2584
          %2935 = vmatprep.subr.mxu0 0.0
          %2936 = vmatpush1.msra.mxu0 %v2583
          %2937 = vmatprep.subr.mxu0 0.0
          %2938 = vmatpush1.msra.mxu0 %v2582
          %2939 = vmatprep.subr.mxu0 0.0
          %2940 = vmatpush1.msra.mxu0 %v2581
          %2941 = vmatprep.subr.mxu0 0.0
          %2942 = vmatpush1.msra.mxu0 %v2580
          %2943 = vmatprep.subr.mxu0 0.0
          %2944 = vmatpush1.msra.mxu0 %v2579
          %2945 = vmatprep.subr.mxu0 0.0
          %2946 = vmatpush1.msra.mxu0 %v2578
          %2947 = vmatprep.subr.mxu0 0.0
          %2948 = vmatpush1.msra.mxu0 %v2577
          %2949 = vmatprep.subr.mxu0 0.0
          %2950 = vmatpush1.msra.mxu0 %v2576
          %2951 = vmatprep.subr.mxu0 0.0
          %2952 = vmatpush1.msra.mxu0 %v2575
          %2953 = vmatprep.subr.mxu0 0.0
          %2954 = vmatpush1.msra.mxu0 %v2574
          %2955 = vmatprep.subr.mxu0 0.0
          %2956 = vmatpush1.msra.mxu0 %v2573
          %2957 = vmatprep.subr.mxu0 0.0
          %2958 = vmatpush1.msra.mxu0 %v2572
          %2959 = vmatprep.subr.mxu0 0.0
          %2960 = vmatpush1.msra.mxu0 %v2571
          %2961 = vmatprep.subr.mxu0 0.0
          %2962 = vmatpush1.msra.mxu0 %v2570
          %2963 = vmatprep.subr.mxu0 0.0
          %2964 = vmatpush1.msra.mxu0 %v2569
          %2965 = vmatprep.subr.mxu0 0.0
          %2966 = vmatpush2.msra.mxu0 %v2600
          %2967 = vmatprep.subr.mxu0 0.0
          %2968 = vmatpush2.msra.mxu0 %v2599
          %2969 = vmatprep.subr.mxu0 0.0
          %2970 = vmatpush2.msra.mxu0 %v2598
          %2971 = vmatprep.subr.mxu0 0.0
          %2972 = vmatpush2.msra.mxu0 %v2597
          %2973 = vmatprep.subr.mxu0 0.0
          %2974 = vmatpush2.msra.mxu0 %v2596
          %2975 = vmatprep.subr.mxu0 0.0
          %2976 = vmatpush2.msra.mxu0 %v2595
          %2977 = vmatprep.subr.mxu0 0.0
          %2978 = vmatpush2.msra.mxu0 %v2594
          %2979 = vmatprep.subr.mxu0 0.0
          %2980 = vmatpush2.msra.mxu0 %v2593
          %2981 = vmatprep.subr.mxu0 0.0
          %2982 = vmatpush2.msra.mxu0 %v2592
          %2983 = vmatprep.subr.mxu0 0.0
          %2984 = vmatpush2.msra.mxu0 %v2591
          %2985 = vmatprep.subr.mxu0 0.0
          %2986 = vmatpush2.msra.mxu0 %v2590
          %2987 = vmatprep.subr.mxu0 0.0
          %2988 = vmatpush2.msra.mxu0 %v2589
          %2989 = vmatprep.subr.mxu0 0.0
          %2990 = vmatpush2.msra.mxu0 %v2588
          %2991 = vmatprep.subr.mxu0 0.0
          %2992 = vmatpush2.msra.mxu0 %v2587
          %2993 = vmatprep.subr.mxu0 0.0
          %2994 = vmatpush2.msra.mxu0 %v2586
          %2995 = vmatprep.subr.mxu0 0.0
          %2996 = vmatpush2.msra.mxu0 %v2585
          %2997 = vmatprep.mubr.f32.mxu0 %v2642
          %2998 = vmatmul.mubr.f32.gmra.mxu0 %v2638
          %v2999 = vpop.f32.mrf.mxu0
          %v3000 = vadd.f32 %v2930, %v2999
          %v3001 = vpop.f32.mrf.mxu0
          %3002 = vdwg.mxu0
          %3003 = vst [vmem:[%s227] sm:$0x1] %v3000
        $region52: #{tpu_custom_call.1} parent=31 // pred_fallthru
          _
        %s3004 = sand.u32 %s111, 1
        %s3005 = scalar_lea.sflag [#allocation5], %s3004
        %s3006 = sand.u32 %s111, 1
        %s3007 = scalar_lea.vmem [#allocation9], %s3006
        // Predicated region
        $region53: #{tpu_custom_call.1} parent=31 // pred_check
          %p3008 = pneg %p121
        $region54: #{tpu_custom_call.1} parent=31 // pred_check_branch
          %3010 = sbr.rel (%p3008) target = $region56
        $region55: #{tpu_custom_call.1} parent=31 // pred_region
          %s3012 = ssub.s32 16, 16
          %3013 = vsyncadd %s3005, %s3012
          %s3014 = smul.addr %s25, 16
          %s3015 = scalar_lea.hbm %s3, %s3014
          %s3017 = sshll.u32 %s3007, 4
          %s3018 = int_to_ptr.vmem [resolvable:$true] %s3017
          %3020 = dma.vmem_to_hbm [thread:$0]  %s3018, 16, %s3015, %s3005
        $region56: #{tpu_custom_call.1} parent=31 // pred_fallthru
          _
      $region32: #{tpu_custom_call.1} parent=5 // pred_fallthru
        _
      %p3021 = scmp.le.s32.totalorder 2, %s16
      // Predicated region
      $region57: #{tpu_custom_call.1} parent=5 // pred_check
        %p3022 = pneg %p3021
      $region58: #{tpu_custom_call.1} parent=5 // pred_check_branch
        %3024 = sbr.rel (%p3022) target = $region60
      $region59: #{tpu_custom_call.1} parent=5 // pred_region
        %s3025 = ssub.s32 %s16, 2
        // Predicated region
        $region61: #{tpu_custom_call.1} parent=59 // pred_check
          %p3026 = pneg %p127
        $region62: #{tpu_custom_call.1} parent=59 // pred_check_branch
          %3028 = sbr.rel (%p3026) target = $region64
        $region63: #{tpu_custom_call.1} parent=59 // pred_region
          %s3029 = sand.u32 %s112, 1
          %s3030 = scalar_lea.sflag [#allocation5], %s3029
          %s3031 = sand.u32 %s112, 1
          %s3032 = scalar_lea.vmem [#allocation9], %s3031
          %3033 = dma.done %s3030, 16
        $region64: #{tpu_custom_call.1} parent=59 // pred_fallthru
          _
      $region60: #{tpu_custom_call.1} parent=5 // pred_fallthru
        _
    $region6: #{tpu_custom_call.1} parent=1 // loop_footer
      %s20 = sadd.s32 1, %s16
    $region7: #{tpu_custom_call.1} parent=1 // loop_footer_branch
      %15 = sbr.rel target = $region3
    $region8: #{tpu_custom_call.1} parent=1 // loop_exit
      _
    %3034 = vsyncpa [#allocation4], 1
    %s3035 = scalar_lea.sflag [#allocation4], 1
    %3036 = vsyncpa %s3035, 1
    %3037 = vsyncpa [#allocation7], 1
    %3038 = vsyncpa [#allocation5], 1
    %s3039 = scalar_lea.sflag [#allocation5], 1
    %3040 = vsyncpa %s3039, 1

</llo_original>
